<compile_context>
chip_gen: v6e
topology: v6e:2x2x1
jax: 0.10.0
libtpu: 0.0.40
codegen_flags: <defaults>
</compile_context>

<pallas_src>
import functools

import jax
import jax.numpy as jnp
from jax import lax
from jax.experimental import pallas as pl
from jax.experimental.pallas import tpu as pltpu


def _cnn_kernel(x_ref, w1_ref, b1_ref, w2_ref, b2_ref,
                fc1w_ref, fc1b_ref, fc2w_ref, fc2b_ref, out_ref,
                *, Bt, L, Lh, L4, Cin):
    """One batch tile (Bt elements); batch is folded into every matmul's M dim."""
    f32 = jnp.float32
    cdt = w1_ref.dtype                           # bf16 compute dtype for MXU operands

    # ---- conv1: three taps as accumulated (Bt*L, Cin) @ (Cin, 64) matmuls -------
    xp = x_ref[...]                              # (Bt, L+2, Cin), zero-padded in time
    x0 = xp[:, 0:L, :].reshape(Bt * L, Cin).astype(cdt)        # x[t-1]
    x1 = xp[:, 1:L + 1, :].reshape(Bt * L, Cin).astype(cdt)    # x[t]
    x2 = xp[:, 2:L + 2, :].reshape(Bt * L, Cin).astype(cdt)    # x[t+1]
    y1 = (jnp.dot(x0, w1_ref[0], preferred_element_type=f32)
          + jnp.dot(x1, w1_ref[1], preferred_element_type=f32)
          + jnp.dot(x2, w1_ref[2], preferred_element_type=f32))
    y1 = jnp.maximum(y1 + b1_ref[...], 0.0)      # (Bt*L, 64) f32

    # ---- maxpool1 (k=2, s=2) fully in registers ----------------------------------
    p1 = jnp.max(y1.reshape(Bt * Lh, 2, 64), axis=1)
    p1 = p1.reshape(Bt, Lh, 64).astype(cdt)      # (Bt, Lh, 64) bf16

    # ---- conv2: shifted rows + three accumulated K=64 matmuls (no 192-lane concat)
    zrow = jnp.zeros((Bt, 1, 64), cdt)
    p_prev = jnp.concatenate([zrow, p1[:, :Lh - 1, :]], axis=1).reshape(Bt * Lh, 64)
    p_mid = p1.reshape(Bt * Lh, 64)
    p_next = jnp.concatenate([p1[:, 1:, :], zrow], axis=1).reshape(Bt * Lh, 64)
    y2 = (jnp.dot(p_prev, w2_ref[0], preferred_element_type=f32)
          + jnp.dot(p_mid, w2_ref[1], preferred_element_type=f32)
          + jnp.dot(p_next, w2_ref[2], preferred_element_type=f32))
    y2 = jnp.maximum(y2 + b2_ref[...], 0.0)      # (Bt*Lh, 128) f32

    # ---- maxpool2 (registers) + fc1 as one (Bt, L4*128) @ (L4*128, 256) matmul ---
    p2 = jnp.max(y2.reshape(Bt * L4, 2, 128), axis=1)           # (Bt*L4, 128)
    z1 = jnp.dot(p2.reshape(Bt, L4 * 128).astype(cdt), fc1w_ref[...],
                 preferred_element_type=f32)
    z1 = jnp.maximum(z1 + fc1b_ref[...], 0.0)    # (Bt, 256) f32

    # ---- fc2 (lane-dense padded output -> unmasked stores) ------------------------
    out_ref[...] = (jnp.dot(z1.astype(cdt), fc2w_ref[...],
                            preferred_element_type=f32) + fc2b_ref[...])


def prepare_params(params, *, compute_dtype=jnp.bfloat16):
    """One-time weight layout prep. Call once per set of weights, not per forward."""
    _, Cin, _ = params["conv1_w"].shape                      # (64, Cin, 3)
    nc = params["fc2_w"].shape[0]
    L4 = params["fc1_w"].shape[1] // 128
    ncp = max(128, ((nc + 127) // 128) * 128)

    # conv taps: w[k] is the (Cin_prev, Cout) matmul weight of tap k
    w1 = jnp.transpose(params["conv1_w"], (2, 1, 0)).astype(compute_dtype)   # (3, Cin, 64)
    w2 = jnp.transpose(params["conv2_w"], (2, 1, 0)).astype(compute_dtype)   # (3, 64, 128)
    b1 = params["conv1_b"].reshape(1, 64).astype(jnp.float32)
    b2 = params["conv2_b"].reshape(1, 128).astype(jnp.float32)
    # torch flatten is channel-major (flat = c*L4 + t); the kernel flattens time-major
    # (flat = t*128 + c) -> bake that permutation into fc1w once.
    fc1w = jnp.transpose(params["fc1_w"].reshape(256, 128, L4),
                         (2, 1, 0)).reshape(L4 * 128, 256).astype(compute_dtype)
    fc1b = params["fc1_b"].reshape(1, 256).astype(jnp.float32)
    fc2w = jnp.zeros((256, ncp), compute_dtype).at[:, :nc].set(
        params["fc2_w"].T.astype(compute_dtype))
    fc2b = jnp.zeros((1, ncp), jnp.float32).at[:, :nc].set(
        params["fc2_b"][None, :].astype(jnp.float32))

    return {"w1": w1, "b1": b1, "w2": w2, "b2": b2,
            "fc1w": fc1w, "fc1b": fc1b, "fc2w": fc2w, "fc2b": fc2b,
            "Cin": int(Cin), "L4": int(L4), "nc": int(nc), "ncp": int(ncp),
            "compute_dtype": compute_dtype}


def _act_bytes_per_elem(L, Cin):
    # rough per-batch-element VMEM footprint of the kernel's intermediates
    return 4 * (L * (Cin + 320) + 1024)


def _pick_batch_tile(N, L, Cin):
    bt = (12 << 20) // _act_bytes_per_elem(L, Cin)      # ~12 MiB activation budget
    bt = max(8, min(256, (bt // 8) * 8))                # 8-aligned, MXU-sized M for fc1
    bt = min(bt, ((N + 7) // 8) * 8)                    # never tile past the padded batch
    if N > 16 and -(-N // bt) < 2:                      # keep >= 2 grid steps (megacore)
        bt = max(8, ((-(-N // 2) + 7) // 8) * 8)
    return int(bt)


def cnn_forward(x_ncl, prepped, *, batch_tile=None):
    """x_ncl: (N, Cin, L) float32 (PyTorch NCL). `prepped` comes from prepare_params."""
    N, Cin, L = x_ncl.shape
    assert L % 4 == 0 and Cin == prepped["Cin"]
    Lh, L4 = L // 2, L // 4
    assert L4 == prepped["L4"]
    nc, ncp = prepped["nc"], prepped["ncp"]

    Bt = int(batch_tile) if batch_tile is not None else _pick_batch_tile(N, L, Cin)
    Np = -(-N // Bt) * Bt

    # per-call input plumbing: NCL -> (Np, L+2, Cin), zero-padded batch + time
    x_pad = jnp.pad(jnp.transpose(x_ncl, (0, 2, 1)),
                    ((0, Np - N), (1, 1), (0, 0)))

    # VMEM budget from the actual block sizes (weights/biases + double-buffered I/O
    # + activation estimate), clamped to stay safe on v7x's 64 MiB physical VMEM.
    esz = jnp.dtype(prepped["compute_dtype"]).itemsize
    weight_bytes = esz * (3 * Cin * 64 + 3 * 64 * 128 + L4 * 128 * 256 + 256 * ncp)
    bias_bytes = 4 * (64 + 128 + 256 + ncp)
    io_bytes = 4 * Bt * ((L + 2) * Cin + ncp)
    vmem_limit = (2 * (weight_bytes + bias_bytes + io_bytes)
                  + Bt * _act_bytes_per_elem(L, Cin) + (8 << 20))
    vmem_limit = int(max(32 << 20, min(96 << 20, vmem_limit)))
    # TODO(synk): for very large L (fc1w ~ 16 KiB*L in bf16) split the FC phase into its
    #             own pallas_call with an "arbitrary" K-tiled reduction over L4 (and a
    #             single-buffered weight stream) so it fits v7x's 64 MiB VMEM.

    kernel = functools.partial(_cnn_kernel, Bt=Bt, L=L, Lh=Lh, L4=L4, Cin=Cin)

    out = pl.pallas_call(
        kernel,
        out_shape=jax.ShapeDtypeStruct((Np, ncp), jnp.float32),
        grid_spec=pltpu.PrefetchScalarGridSpec(
            num_scalar_prefetch=0,
            grid=(Np // Bt,),
            in_specs=[
                pl.BlockSpec((Bt, L + 2, Cin), lambda b: (b, 0, 0)),
                pl.BlockSpec((3, Cin, 64), lambda b: (0, 0, 0)),
                pl.BlockSpec((1, 64), lambda b: (0, 0)),
                pl.BlockSpec((3, 64, 128), lambda b: (0, 0, 0)),
                pl.BlockSpec((1, 128), lambda b: (0, 0)),
                pl.BlockSpec((L4 * 128, 256), lambda b: (0, 0)),
                pl.BlockSpec((1, 256), lambda b: (0, 0)),
                pl.BlockSpec((256, ncp), lambda b: (0, 0)),
                pl.BlockSpec((1, ncp), lambda b: (0, 0)),
            ],
            out_specs=pl.BlockSpec((Bt, ncp), lambda b: (b, 0)),
        ),
        compiler_params=pltpu.CompilerParams(
            dimension_semantics=("parallel",),
            vmem_limit_bytes=vmem_limit),
    )(x_pad, prepped["w1"], prepped["b1"], prepped["w2"], prepped["b2"],
      prepped["fc1w"], prepped["fc1b"], prepped["fc2w"], prepped["fc2b"])

    return out[:N, :nc]


def reference_forward(x_ncl, params):
    """Pure-JAX f32 reference mirroring the PyTorch module exactly."""
    dn = ("NCH", "OIH", "NCH")
    y = lax.conv_general_dilated(x_ncl, params["conv1_w"], (1,), [(1, 1)],
                                 dimension_numbers=dn)
    y = jnp.maximum(y + params["conv1_b"][None, :, None], 0.0)
    N, C, Lc = y.shape
    y = y.reshape(N, C, Lc // 2, 2).max(axis=-1)
    y = lax.conv_general_dilated(y, params["conv2_w"], (1,), [(1, 1)],
                                 dimension_numbers=dn)
    y = jnp.maximum(y + params["conv2_b"][None, :, None], 0.0)
    N, C, Lc = y.shape
    y = y.reshape(N, C, Lc // 2, 2).max(axis=-1)
    y = y.reshape(N, -1)                                     # channel-major flatten
    y = jnp.maximum(y @ params["fc1_w"].T + params["fc1_b"], 0.0)
    return y @ params["fc2_w"].T + params["fc2_b"]


def init_params(key, Cin, L, num_classes):
    ks = jax.random.split(key, 8)

    def u(k, shape, fan_in):
        bound = 1.0 / jnp.sqrt(fan_in)
        return jax.random.uniform(k, shape, jnp.float32, -bound, bound)

    L4 = L // 4
    return {
        "conv1_w": u(ks[0], (64, Cin, 3), Cin * 3),
        "conv1_b": u(ks[1], (64,), Cin * 3),
        "conv2_w": u(ks[2], (128, 64, 3), 64 * 3),
        "conv2_b": u(ks[3], (128,), 64 * 3),
        "fc1_w": u(ks[4], (256, 128 * L4), 128 * L4),
        "fc1_b": u(ks[5], (256,), 128 * L4),
        "fc2_w": u(ks[6], (num_classes, 256), 256),
        "fc2_b": u(ks[7], (num_classes,), 256),
    }


if __name__ == "__main__":
    key = jax.random.PRNGKey(0)
    N, Cin, L, num_classes = 2, 4, 16, 3   # small shapes; L plays the role of X.shape[1]

    kp, kx = jax.random.split(key)
    params = init_params(kp, Cin, L, num_classes)
    x = jax.random.normal(kx, (N, Cin, L), jnp.float32)      # NCL, like the PyTorch module

    prepped = prepare_params(params)       # one-time weight layout prep (hoisted)
    out = cnn_forward(x, prepped)
    jax.block_until_ready(out)

    ref = reference_forward(x, params)
    assert out.shape == (N, num_classes)
    # bf16 matmul operands (f32 accumulation) -> loosened tolerance vs the f32 reference
    assert jnp.allclose(out, ref, atol=5e-2, rtol=5e-2), (out, ref)

    print("KERNEL_OK")
</pallas_src>

<mosaic_0001>
module attributes {stable_mosaic.version = 11 : i64} {
  func.func @_cnn_kernel(%arg0: i32, %arg1: memref<8x18x4xf32, #tpu.memory_space<vmem>>, %arg2: memref<3x4x64xbf16, #tpu.memory_space<vmem>>, %arg3: memref<1x64xf32, #tpu.memory_space<vmem>>, %arg4: memref<3x64x128xbf16, #tpu.memory_space<vmem>>, %arg5: memref<1x128xf32, #tpu.memory_space<vmem>>, %arg6: memref<512x256xbf16, #tpu.memory_space<vmem>>, %arg7: memref<1x256xf32, #tpu.memory_space<vmem>>, %arg8: memref<256x128xbf16, #tpu.memory_space<vmem>>, %arg9: memref<1x128xf32, #tpu.memory_space<vmem>>, %arg10: memref<8x128xf32, #tpu.memory_space<vmem>>) attributes {dimension_semantics = [#tpu.dimension_semantics<parallel>], iteration_bounds = array<i64: 1>, scalar_prefetch = 0 : i64, scratch_operands = 0 : i64, tpu.core_type = #tpu.core_type<tc>, window_params = [{transform_indices = @transform_0, window_bounds = array<i64: 8, 18, 4>}, {pipeline_mode = #tpu.pipeline_mode<synchronous>, transform_indices = @transform_1, window_bounds = array<i64: 3, 4, 64>}, {pipeline_mode = #tpu.pipeline_mode<synchronous>, transform_indices = @transform_2, window_bounds = array<i64: 1, 64>}, {pipeline_mode = #tpu.pipeline_mode<synchronous>, transform_indices = @transform_3, window_bounds = array<i64: 3, 64, 128>}, {pipeline_mode = #tpu.pipeline_mode<synchronous>, transform_indices = @transform_4, window_bounds = array<i64: 1, 128>}, {pipeline_mode = #tpu.pipeline_mode<synchronous>, transform_indices = @transform_5, window_bounds = array<i64: 512, 256>}, {pipeline_mode = #tpu.pipeline_mode<synchronous>, transform_indices = @transform_6, window_bounds = array<i64: 1, 256>}, {pipeline_mode = #tpu.pipeline_mode<synchronous>, transform_indices = @transform_7, window_bounds = array<i64: 256, 128>}, {pipeline_mode = #tpu.pipeline_mode<synchronous>, transform_indices = @transform_8, window_bounds = array<i64: 1, 128>}, {transform_indices = @transform_9, window_bounds = array<i64: 8, 128>}]} {
    %c0 = arith.constant 0 : index
    %c0_0 = arith.constant 0 : index
    %c0_1 = arith.constant 0 : index
    %0 = vector.load %arg1[%c0, %c0_0, %c0_1] : memref<8x18x4xf32, #tpu.memory_space<vmem>>, vector<8x18x4xf32>
    %1 = vector.extract_strided_slice %0 {offsets = [0, 0, 0], sizes = [8, 16, 4], strides = [1, 1, 1]} : vector<8x18x4xf32> to vector<8x16x4xf32>
    %2 = vector.shape_cast %1 : vector<8x16x4xf32> to vector<128x4xf32>
    %3 = arith.truncf %2 : vector<128x4xf32> to vector<128x4xbf16>
    %4 = vector.extract_strided_slice %0 {offsets = [0, 1, 0], sizes = [8, 16, 4], strides = [1, 1, 1]} : vector<8x18x4xf32> to vector<8x16x4xf32>
    %5 = vector.shape_cast %4 : vector<8x16x4xf32> to vector<128x4xf32>
    %6 = arith.truncf %5 : vector<128x4xf32> to vector<128x4xbf16>
    %7 = vector.extract_strided_slice %0 {offsets = [0, 2, 0], sizes = [8, 16, 4], strides = [1, 1, 1]} : vector<8x18x4xf32> to vector<8x16x4xf32>
    %8 = vector.shape_cast %7 : vector<8x16x4xf32> to vector<128x4xf32>
    %9 = arith.truncf %8 : vector<128x4xf32> to vector<128x4xbf16>
    %c0_2 = arith.constant 0 : index
    %c0_3 = arith.constant 0 : index
    %c0_4 = arith.constant 0 : index
    %10 = vector.load %arg2[%c0_2, %c0_3, %c0_4] : memref<3x4x64xbf16, #tpu.memory_space<vmem>>, vector<1x4x64xbf16>
    %11 = vector.shape_cast %10 : vector<1x4x64xbf16> to vector<4x64xbf16>
    %cst = arith.constant dense<0.000000e+00> : vector<128x64xf32>
    %12 = tpu.matmul %3, %11, %cst {dimension_numbers = #tpu.dot_dimension_numbers<[1], [0], [0], [1], [0, 0, 1, 1], [], []>} : vector<128x4xbf16>, vector<4x64xbf16>, vector<128x64xf32> -> vector<128x64xf32>
    %c1 = arith.constant 1 : index
    %c0_5 = arith.constant 0 : index
    %c0_6 = arith.constant 0 : index
    %13 = vector.load %arg2[%c1, %c0_5, %c0_6] : memref<3x4x64xbf16, #tpu.memory_space<vmem>>, vector<1x4x64xbf16>
    %14 = vector.shape_cast %13 : vector<1x4x64xbf16> to vector<4x64xbf16>
    %cst_7 = arith.constant dense<0.000000e+00> : vector<128x64xf32>
    %15 = tpu.matmul %6, %14, %cst_7 {dimension_numbers = #tpu.dot_dimension_numbers<[1], [0], [0], [1], [0, 0, 1, 1], [], []>} : vector<128x4xbf16>, vector<4x64xbf16>, vector<128x64xf32> -> vector<128x64xf32>
    %16 = arith.addf %12, %15 : vector<128x64xf32>
    %c2 = arith.constant 2 : index
    %c0_8 = arith.constant 0 : index
    %c0_9 = arith.constant 0 : index
    %17 = vector.load %arg2[%c2, %c0_8, %c0_9] : memref<3x4x64xbf16, #tpu.memory_space<vmem>>, vector<1x4x64xbf16>
    %18 = vector.shape_cast %17 : vector<1x4x64xbf16> to vector<4x64xbf16>
    %cst_10 = arith.constant dense<0.000000e+00> : vector<128x64xf32>
    %19 = tpu.matmul %9, %18, %cst_10 {dimension_numbers = #tpu.dot_dimension_numbers<[1], [0], [0], [1], [0, 0, 1, 1], [], []>} : vector<128x4xbf16>, vector<4x64xbf16>, vector<128x64xf32> -> vector<128x64xf32>
    %20 = arith.addf %16, %19 : vector<128x64xf32>
    %c0_11 = arith.constant 0 : index
    %c0_12 = arith.constant 0 : index
    %21 = vector.load %arg3[%c0_11, %c0_12] : memref<1x64xf32, #tpu.memory_space<vmem>>, vector<1x64xf32>
    %22 = vector.broadcast %21 : vector<1x64xf32> to vector<128x64xf32>
    %23 = arith.addf %20, %22 : vector<128x64xf32>
    %cst_13 = arith.constant 0.000000e+00 : f32
    %24 = vector.broadcast %cst_13 : f32 to vector<128x64xf32>
    %25 = arith.maximumf %23, %24 : vector<128x64xf32>
    %26 = vector.shape_cast %25 : vector<128x64xf32> to vector<64x2x64xf32>
    %cst_14 = arith.constant dense<0xFF800000> : vector<64x64xf32>
    %27 = vector.multi_reduction <maximumf>, %26, %cst_14 [1] : vector<64x2x64xf32> to vector<64x64xf32>
    %28 = vector.shape_cast %27 : vector<64x64xf32> to vector<8x8x64xf32>
    %29 = arith.truncf %28 : vector<8x8x64xf32> to vector<8x8x64xbf16>
    %cst_15 = arith.constant 0.000000e+00 : bf16
    %30 = vector.broadcast %cst_15 : bf16 to vector<8x1x64xbf16>
    %31 = vector.extract_strided_slice %29 {offsets = [0, 0, 0], sizes = [8, 7, 64], strides = [1, 1, 1]} : vector<8x8x64xbf16> to vector<8x7x64xbf16>
    %32 = tpu.concatenate %30, %31 in 1 : vector<8x1x64xbf16>, vector<8x7x64xbf16> -> vector<8x8x64xbf16>
    %33 = vector.shape_cast %32 : vector<8x8x64xbf16> to vector<64x64xbf16>
    %34 = vector.shape_cast %29 : vector<8x8x64xbf16> to vector<64x64xbf16>
    %35 = vector.extract_strided_slice %29 {offsets = [0, 1, 0], sizes = [8, 7, 64], strides = [1, 1, 1]} : vector<8x8x64xbf16> to vector<8x7x64xbf16>
    %36 = tpu.concatenate %35, %30 in 1 : vector<8x7x64xbf16>, vector<8x1x64xbf16> -> vector<8x8x64xbf16>
    %37 = vector.shape_cast %36 : vector<8x8x64xbf16> to vector<64x64xbf16>
    %c0_16 = arith.constant 0 : index
    %c0_17 = arith.constant 0 : index
    %c0_18 = arith.constant 0 : index
    %38 = vector.load %arg4[%c0_16, %c0_17, %c0_18] : memref<3x64x128xbf16, #tpu.memory_space<vmem>>, vector<1x64x128xbf16>
    %39 = vector.shape_cast %38 : vector<1x64x128xbf16> to vector<64x128xbf16>
    %cst_19 = arith.constant dense<0.000000e+00> : vector<64x128xf32>
    %40 = tpu.matmul %33, %39, %cst_19 {dimension_numbers = #tpu.dot_dimension_numbers<[1], [0], [0], [1], [0, 0, 1, 1], [], []>} : vector<64x64xbf16>, vector<64x128xbf16>, vector<64x128xf32> -> vector<64x128xf32>
    %c1_20 = arith.constant 1 : index
    %c0_21 = arith.constant 0 : index
    %c0_22 = arith.constant 0 : index
    %41 = vector.load %arg4[%c1_20, %c0_21, %c0_22] : memref<3x64x128xbf16, #tpu.memory_space<vmem>>, vector<1x64x128xbf16>
    %42 = vector.shape_cast %41 : vector<1x64x128xbf16> to vector<64x128xbf16>
    %cst_23 = arith.constant dense<0.000000e+00> : vector<64x128xf32>
    %43 = tpu.matmul %34, %42, %cst_23 {dimension_numbers = #tpu.dot_dimension_numbers<[1], [0], [0], [1], [0, 0, 1, 1], [], []>} : vector<64x64xbf16>, vector<64x128xbf16>, vector<64x128xf32> -> vector<64x128xf32>
    %44 = arith.addf %40, %43 : vector<64x128xf32>
    %c2_24 = arith.constant 2 : index
    %c0_25 = arith.constant 0 : index
    %c0_26 = arith.constant 0 : index
    %45 = vector.load %arg4[%c2_24, %c0_25, %c0_26] : memref<3x64x128xbf16, #tpu.memory_space<vmem>>, vector<1x64x128xbf16>
    %46 = vector.shape_cast %45 : vector<1x64x128xbf16> to vector<64x128xbf16>
    %cst_27 = arith.constant dense<0.000000e+00> : vector<64x128xf32>
    %47 = tpu.matmul %37, %46, %cst_27 {dimension_numbers = #tpu.dot_dimension_numbers<[1], [0], [0], [1], [0, 0, 1, 1], [], []>} : vector<64x64xbf16>, vector<64x128xbf16>, vector<64x128xf32> -> vector<64x128xf32>
    %48 = arith.addf %44, %47 : vector<64x128xf32>
    %c0_28 = arith.constant 0 : index
    %c0_29 = arith.constant 0 : index
    %49 = vector.load %arg5[%c0_28, %c0_29] : memref<1x128xf32, #tpu.memory_space<vmem>>, vector<1x128xf32>
    %50 = vector.broadcast %49 : vector<1x128xf32> to vector<64x128xf32>
    %51 = arith.addf %48, %50 : vector<64x128xf32>
    %cst_30 = arith.constant 0.000000e+00 : f32
    %52 = vector.broadcast %cst_30 : f32 to vector<64x128xf32>
    %53 = arith.maximumf %51, %52 : vector<64x128xf32>
    %54 = vector.shape_cast %53 : vector<64x128xf32> to vector<32x2x128xf32>
    %cst_31 = arith.constant dense<0xFF800000> : vector<32x128xf32>
    %55 = vector.multi_reduction <maximumf>, %54, %cst_31 [1] : vector<32x2x128xf32> to vector<32x128xf32>
    %56 = vector.shape_cast %55 : vector<32x128xf32> to vector<8x512xf32>
    %57 = arith.truncf %56 : vector<8x512xf32> to vector<8x512xbf16>
    %c0_32 = arith.constant 0 : index
    %c0_33 = arith.constant 0 : index
    %58 = vector.load %arg6[%c0_32, %c0_33] : memref<512x256xbf16, #tpu.memory_space<vmem>>, vector<512x256xbf16>
    %cst_34 = arith.constant dense<0.000000e+00> : vector<8x256xf32>
    %59 = tpu.matmul %57, %58, %cst_34 {dimension_numbers = #tpu.dot_dimension_numbers<[1], [0], [0], [1], [0, 0, 1, 1], [], []>} : vector<8x512xbf16>, vector<512x256xbf16>, vector<8x256xf32> -> vector<8x256xf32>
    %c0_35 = arith.constant 0 : index
    %c0_36 = arith.constant 0 : index
    %60 = vector.load %arg7[%c0_35, %c0_36] : memref<1x256xf32, #tpu.memory_space<vmem>>, vector<1x256xf32>
    %61 = vector.broadcast %60 : vector<1x256xf32> to vector<8x256xf32>
    %62 = arith.addf %59, %61 : vector<8x256xf32>
    %cst_37 = arith.constant 0.000000e+00 : f32
    %63 = vector.broadcast %cst_37 : f32 to vector<8x256xf32>
    %64 = arith.maximumf %62, %63 : vector<8x256xf32>
    %65 = arith.truncf %64 : vector<8x256xf32> to vector<8x256xbf16>
    %c0_38 = arith.constant 0 : index
    %c0_39 = arith.constant 0 : index
    %66 = vector.load %arg8[%c0_38, %c0_39] : memref<256x128xbf16, #tpu.memory_space<vmem>>, vector<256x128xbf16>
    %cst_40 = arith.constant dense<0.000000e+00> : vector<8x128xf32>
    %67 = tpu.matmul %65, %66, %cst_40 {dimension_numbers = #tpu.dot_dimension_numbers<[1], [0], [0], [1], [0, 0, 1, 1], [], []>} : vector<8x256xbf16>, vector<256x128xbf16>, vector<8x128xf32> -> vector<8x128xf32>
    %c0_41 = arith.constant 0 : index
    %c0_42 = arith.constant 0 : index
    %68 = vector.load %arg9[%c0_41, %c0_42] : memref<1x128xf32, #tpu.memory_space<vmem>>, vector<1x128xf32>
    %69 = vector.broadcast %68 : vector<1x128xf32> to vector<8x128xf32>
    %70 = arith.addf %67, %69 : vector<8x128xf32>
    %c0_43 = arith.constant 0 : index
    %c0_44 = arith.constant 0 : index
    %71 = vector.load %arg10[%c0_43, %c0_44] : memref<8x128xf32, #tpu.memory_space<vmem>>, vector<8x128xf32>
    tpu.vector_store %arg10[%c0_43, %c0_44], %70 {strides = array<i32>} : memref<8x128xf32, #tpu.memory_space<vmem>>, vector<8x128xf32>,
    return
  }
  func.func @transform_0(%arg0: i32) -> (i32, i32, i32) {
    %c0_i32 = arith.constant 0 : i32
    %c0_i32_0 = arith.constant 0 : i32
    %c0_i32_1 = arith.constant 0 : i32
    return %arg0, %c0_i32, %c0_i32_0 : i32, i32, i32
  }
  func.func @transform_1(%arg0: i32) -> (i32, i32, i32) {
    %c0_i32 = arith.constant 0 : i32
    %c0_i32_0 = arith.constant 0 : i32
    %c0_i32_1 = arith.constant 0 : i32
    %c0_i32_2 = arith.constant 0 : i32
    return %c0_i32, %c0_i32_0, %c0_i32_1 : i32, i32, i32
  }
  func.func @transform_2(%arg0: i32) -> (i32, i32) {
    %c0_i32 = arith.constant 0 : i32
    %c0_i32_0 = arith.constant 0 : i32
    %c0_i32_1 = arith.constant 0 : i32
    return %c0_i32, %c0_i32_0 : i32, i32
  }
  func.func @transform_3(%arg0: i32) -> (i32, i32, i32) {
    %c0_i32 = arith.constant 0 : i32
    %c0_i32_0 = arith.constant 0 : i32
    %c0_i32_1 = arith.constant 0 : i32
    %c0_i32_2 = arith.constant 0 : i32
    return %c0_i32, %c0_i32_0, %c0_i32_1 : i32, i32, i32
  }
  func.func @transform_4(%arg0: i32) -> (i32, i32) {
    %c0_i32 = arith.constant 0 : i32
    %c0_i32_0 = arith.constant 0 : i32
    %c0_i32_1 = arith.constant 0 : i32
    return %c0_i32, %c0_i32_0 : i32, i32
  }
  func.func @transform_5(%arg0: i32) -> (i32, i32) {
    %c0_i32 = arith.constant 0 : i32
    %c0_i32_0 = arith.constant 0 : i32
    %c0_i32_1 = arith.constant 0 : i32
    return %c0_i32, %c0_i32_0 : i32, i32
  }
  func.func @transform_6(%arg0: i32) -> (i32, i32) {
    %c0_i32 = arith.constant 0 : i32
    %c0_i32_0 = arith.constant 0 : i32
    %c0_i32_1 = arith.constant 0 : i32
    return %c0_i32, %c0_i32_0 : i32, i32
  }
  func.func @transform_7(%arg0: i32) -> (i32, i32) {
    %c0_i32 = arith.constant 0 : i32
    %c0_i32_0 = arith.constant 0 : i32
    %c0_i32_1 = arith.constant 0 : i32
    return %c0_i32, %c0_i32_0 : i32, i32
  }
  func.func @transform_8(%arg0: i32) -> (i32, i32) {
    %c0_i32 = arith.constant 0 : i32
    %c0_i32_0 = arith.constant 0 : i32
    %c0_i32_1 = arith.constant 0 : i32
    return %c0_i32, %c0_i32_0 : i32, i32
  }
  func.func @transform_9(%arg0: i32) -> (i32, i32) {
    %c0_i32 = arith.constant 0 : i32
    %c0_i32_0 = arith.constant 0 : i32
    return %arg0, %c0_i32 : i32, i32
  }
}

</mosaic_0001>

<llo_original>
// kernel: tpu_custom_call.1
$region0: #{tpu_custom_call.1}
  #allocation0 [shape = 'u32[]', space=smem, size = 0x4, offset = 0x4, fixed_abs, tag = 'smem constant byte address 0x4 - core index']
  #allocation1 [shape = 'u32[144,128]{1,0:T(1,128)}', space=vmem, size = 0x12000, scoped, tag = 'internal scratch']
  %s0 = inlined_call_operand.vmem [shape: f32[8,18,4], index: 0, kind: input, shape index: {}]
  %s1 = inlined_call_operand.vmem [shape: bf16[3,4,64], index: 1, kind: input, shape index: {}]
  %s2 = inlined_call_operand.vmem [shape: f32[1,64], index: 2, kind: input, shape index: {}]
  %s3 = inlined_call_operand.vmem [shape: bf16[3,64,128], index: 3, kind: input, shape index: {}]
  %s4 = inlined_call_operand.vmem [shape: f32[1,128], index: 4, kind: input, shape index: {}]
  %s5 = inlined_call_operand.hbm [shape: bf16[512,256], index: 5, kind: input, shape index: {}]
  %s6 = inlined_call_operand.vmem [shape: f32[1,256], index: 6, kind: input, shape index: {}]
  %s7 = inlined_call_operand.vmem [shape: bf16[256,128], index: 7, kind: input, shape index: {}]
  %s8 = inlined_call_operand.vmem [shape: f32[1,128], index: 8, kind: input, shape index: {}]
  %s9 = inlined_call_operand.hbm [shape: f32[8,128], index: 9, kind: output, shape index: {}]
  %s10 = sld [smem:[#allocation0]]
  $region50: #{tpu_custom_call.1} parent=0
    _
  %s12 = ssub.s32 1, %s10
  %s13 = scalar_select 0, %s12, %s10
  $region1: #{tpu_custom_call.1} parent=0
    #allocation2 [shape = 'u8[262144]{0}', space=vmem, size = 0x40000, scoped, tag = 'input window, operand 5, single buffered']
    #allocation3 [shape = 's32[1]{0}', space=sflag, size = 0x4, scoped, tag = 'scoped memory for tpu_custom_call.1']
    #allocation4 [shape = 's32[1]{0}', space=sflag, size = 0x4, scoped, tag = 'scoped memory for tpu_custom_call.1']
    #allocation5 [shape = 'u8[4096]{0}', space=vmem, size = 0x1000, scoped, tag = 'output window, operand 0, single buffered']
    %14 = vsyncpa [#allocation3], 0
    %15 = vsyncpa [#allocation4], 0
    // Predicated region
    $region2: #{tpu_custom_call.1} parent=1 // pred_check
      _
    $region3: #{tpu_custom_call.1} parent=1 // pred_check_branch
      %17 = sbr.rel (0) target = $region5
    $region4: #{tpu_custom_call.1} parent=1 // pred_region
      _
    $region5: #{tpu_custom_call.1} parent=1 // pred_fallthru
      _
    // Predicated region
    $region6: #{tpu_custom_call.1} parent=1 // pred_check
      _
    $region7: #{tpu_custom_call.1} parent=1 // pred_check_branch
      %19 = sbr.rel (0) target = $region9
    $region8: #{tpu_custom_call.1} parent=1 // pred_region
      _
    $region9: #{tpu_custom_call.1} parent=1 // pred_fallthru
      _
    // Predicated region
    $region10: #{tpu_custom_call.1} parent=1 // pred_check
      _
    $region11: #{tpu_custom_call.1} parent=1 // pred_check_branch
      %21 = sbr.rel (0) target = $region13
    $region12: #{tpu_custom_call.1} parent=1 // pred_region
      _
    $region13: #{tpu_custom_call.1} parent=1 // pred_fallthru
      _
    // Predicated region
    $region14: #{tpu_custom_call.1} parent=1 // pred_check
      _
    $region15: #{tpu_custom_call.1} parent=1 // pred_check_branch
      %23 = sbr.rel (0) target = $region17
    $region16: #{tpu_custom_call.1} parent=1 // pred_region
      _
    $region17: #{tpu_custom_call.1} parent=1 // pred_fallthru
      _
    // Predicated region
    $region18: #{tpu_custom_call.1} parent=1 // pred_check
      _
    $region19: #{tpu_custom_call.1} parent=1 // pred_check_branch
      %25 = sbr.rel (0) target = $region21
    $region20: #{tpu_custom_call.1} parent=1 // pred_region
      _
    $region21: #{tpu_custom_call.1} parent=1 // pred_fallthru
      _
    // Predicated region
    $region22: #{tpu_custom_call.1} parent=1 // pred_check
      _
    $region23: #{tpu_custom_call.1} parent=1 // pred_check_branch
      %27 = sbr.rel (0) target = $region25
    $region24: #{tpu_custom_call.1} parent=1 // pred_region
      %s29 = ssub.s32 8192, 8192
      %30 = vsyncadd [#allocation3], %s29
      %s31 = sshll.u32 [#allocation2], 4
      %s32 = int_to_ptr.vmem [resolvable:$true] %s31
      %37 = dma.hbm_to_vmem [thread:$0]  %s5, 8192, %s32, [#allocation3], 128, 128, 8
    $region25: #{tpu_custom_call.1} parent=1 // pred_fallthru
      _
    // Predicated region
    $region26: #{tpu_custom_call.1} parent=1 // pred_check
      _
    $region27: #{tpu_custom_call.1} parent=1 // pred_check_branch
      %39 = sbr.rel (0) target = $region29
    $region28: #{tpu_custom_call.1} parent=1 // pred_region
      _
    $region29: #{tpu_custom_call.1} parent=1 // pred_fallthru
      _
    // Predicated region
    $region30: #{tpu_custom_call.1} parent=1 // pred_check
      _
    $region31: #{tpu_custom_call.1} parent=1 // pred_check_branch
      %41 = sbr.rel (0) target = $region33
    $region32: #{tpu_custom_call.1} parent=1 // pred_region
      _
    $region33: #{tpu_custom_call.1} parent=1 // pred_fallthru
      _
    // Predicated region
    $region34: #{tpu_custom_call.1} parent=1 // pred_check
      _
    $region35: #{tpu_custom_call.1} parent=1 // pred_check_branch
      %43 = sbr.rel (0) target = $region37
    $region36: #{tpu_custom_call.1} parent=1 // pred_region
      _
    $region37: #{tpu_custom_call.1} parent=1 // pred_fallthru
      _
    // Predicated region
    $region38: #{tpu_custom_call.1} parent=1 // pred_check
      _
    $region39: #{tpu_custom_call.1} parent=1 // pred_check_branch
      %45 = sbr.rel (0) target = $region41
    $region40: #{tpu_custom_call.1} parent=1 // pred_region
      %46 = dma.done [#allocation3], 8192
    $region41: #{tpu_custom_call.1} parent=1 // pred_fallthru
      _
    %v48 = vld [vmem:[%s0] sm:$0xff]
    %v49 = vld [vmem:[%s0 + $0x8] sm:$0xff]
    %v50 = vld [vmem:[%s0 + $0x10] sm:$0x3]
    %v51 = vld [vmem:[%s0 + $0x18] sm:$0xff]
    %v52 = vld [vmem:[%s0 + $0x20] sm:$0xff]
    %v53 = vld [vmem:[%s0 + $0x28] sm:$0x3]
    %v54 = vld [vmem:[%s0 + $0x30] sm:$0xff]
    %v55 = vld [vmem:[%s0 + $0x38] sm:$0xff]
    %v56 = vld [vmem:[%s0 + $0x40] sm:$0x3]
    %v57 = vld [vmem:[%s0 + $0x48] sm:$0xff]
    %v58 = vld [vmem:[%s0 + $0x50] sm:$0xff]
    %v59 = vld [vmem:[%s0 + $0x58] sm:$0x3]
    %v60 = vld [vmem:[%s0 + $0x60] sm:$0xff]
    %v61 = vld [vmem:[%s0 + $0x68] sm:$0xff]
    %v62 = vld [vmem:[%s0 + $0x70] sm:$0x3]
    %v63 = vld [vmem:[%s0 + $0x78] sm:$0xff]
    %v64 = vld [vmem:[%s0 + $0x80] sm:$0xff]
    %v65 = vld [vmem:[%s0 + $0x88] sm:$0x3]
    %v66 = vld [vmem:[%s0 + $0x90] sm:$0xff]
    %v67 = vld [vmem:[%s0 + $0x98] sm:$0xff]
    %v68 = vld [vmem:[%s0 + $0xa0] sm:$0x3]
    %v69 = vld [vmem:[%s0 + $0xa8] sm:$0xff]
    %v70 = vld [vmem:[%s0 + $0xb0] sm:$0xff]
    %v71 = vld [vmem:[%s0 + $0xb8] sm:$0x3]
    %v72 = vpack.c.bf16 %v49, %v48
    %v73 = vpack.c.bf16 %v52, %v51
    %v74 = vpack.c.bf16 %v55, %v54
    %v75 = vpack.c.bf16 %v58, %v57
    %v76 = vpack.c.bf16 %v61, %v60
    %v77 = vpack.c.bf16 %v64, %v63
    %v78 = vpack.c.bf16 %v67, %v66
    %v79 = vpack.c.bf16 %v70, %v69
    %vm104 = vcmask 1046528
    %v105 = vrot.slane %v48, 1
    %v106 = vrot.slane %v49, 1
    %v107 = vsel %vm104, %v105, %v106
    %v108 = vrot.slane %v50, 1
    %v109 = vsel %vm104, %v106, %v108
    %v110 = vrot.slane %v51, 1
    %v111 = vrot.slane %v52, 1
    %v112 = vsel %vm104, %v110, %v111
    %v113 = vrot.slane %v53, 1
    %v114 = vsel %vm104, %v111, %v113
    %v115 = vrot.slane %v54, 1
    %v116 = vrot.slane %v55, 1
    %v117 = vsel %vm104, %v115, %v116
    %v118 = vrot.slane %v56, 1
    %v119 = vsel %vm104, %v116, %v118
    %v120 = vrot.slane %v57, 1
    %v121 = vrot.slane %v58, 1
    %v122 = vsel %vm104, %v120, %v121
    %v123 = vrot.slane %v59, 1
    %v124 = vsel %vm104, %v121, %v123
    %v125 = vrot.slane %v60, 1
    %v126 = vrot.slane %v61, 1
    %v127 = vsel %vm104, %v125, %v126
    %v128 = vrot.slane %v62, 1
    %v129 = vsel %vm104, %v126, %v128
    %v130 = vrot.slane %v63, 1
    %v131 = vrot.slane %v64, 1
    %v132 = vsel %vm104, %v130, %v131
    %v133 = vrot.slane %v65, 1
    %v134 = vsel %vm104, %v131, %v133
    %v135 = vrot.slane %v66, 1
    %v136 = vrot.slane %v67, 1
    %v137 = vsel %vm104, %v135, %v136
    %v138 = vrot.slane %v68, 1
    %v139 = vsel %vm104, %v136, %v138
    %v140 = vrot.slane %v69, 1
    %v141 = vrot.slane %v70, 1
    %v142 = vsel %vm104, %v140, %v141
    %v143 = vrot.slane %v71, 1
    %v144 = vsel %vm104, %v141, %v143
    %v161 = vpack.c.bf16 %v109, %v107
    %v162 = vpack.c.bf16 %v114, %v112
    %v163 = vpack.c.bf16 %v119, %v117
    %v164 = vpack.c.bf16 %v124, %v122
    %v165 = vpack.c.bf16 %v129, %v127
    %v166 = vpack.c.bf16 %v134, %v132
    %v167 = vpack.c.bf16 %v139, %v137
    %v168 = vpack.c.bf16 %v144, %v142
    %vm169 = vcmask 1045504
    %v170 = vrot.slane %v48, 2
    %v171 = vrot.slane %v49, 2
    %v172 = vsel %vm169, %v170, %v171
    %v173 = vrot.slane %v50, 2
    %v174 = vsel %vm169, %v171, %v173
    %v175 = vrot.slane %v51, 2
    %v176 = vrot.slane %v52, 2
    %v177 = vsel %vm169, %v175, %v176
    %v178 = vrot.slane %v53, 2
    %v179 = vsel %vm169, %v176, %v178
    %v180 = vrot.slane %v54, 2
    %v181 = vrot.slane %v55, 2
    %v182 = vsel %vm169, %v180, %v181
    %v183 = vrot.slane %v56, 2
    %v184 = vsel %vm169, %v181, %v183
    %v185 = vrot.slane %v57, 2
    %v186 = vrot.slane %v58, 2
    %v187 = vsel %vm169, %v185, %v186
    %v188 = vrot.slane %v59, 2
    %v189 = vsel %vm169, %v186, %v188
    %v190 = vrot.slane %v60, 2
    %v191 = vrot.slane %v61, 2
    %v192 = vsel %vm169, %v190, %v191
    %v193 = vrot.slane %v62, 2
    %v194 = vsel %vm169, %v191, %v193
    %v195 = vrot.slane %v63, 2
    %v196 = vrot.slane %v64, 2
    %v197 = vsel %vm169, %v195, %v196
    %v198 = vrot.slane %v65, 2
    %v199 = vsel %vm169, %v196, %v198
    %v200 = vrot.slane %v66, 2
    %v201 = vrot.slane %v67, 2
    %v202 = vsel %vm169, %v200, %v201
    %v203 = vrot.slane %v68, 2
    %v204 = vsel %vm169, %v201, %v203
    %v205 = vrot.slane %v69, 2
    %v206 = vrot.slane %v70, 2
    %v207 = vsel %vm169, %v205, %v206
    %v208 = vrot.slane %v71, 2
    %v209 = vsel %vm169, %v206, %v208
    %v226 = vpack.c.bf16 %v174, %v172
    %v227 = vpack.c.bf16 %v179, %v177
    %v228 = vpack.c.bf16 %v184, %v182
    %v229 = vpack.c.bf16 %v189, %v187
    %v230 = vpack.c.bf16 %v194, %v192
    %v231 = vpack.c.bf16 %v199, %v197
    %v232 = vpack.c.bf16 %v204, %v202
    %v233 = vpack.c.bf16 %v209, %v207
    %v234 = vld [vmem:[%s1] sm:$0x3]
    %s235 = scalar_lea.vmem %s1, 2
    %v236 = vld [vmem:[%s235] sm:$0x3]
    %vm237 = vcmask 31744
    %v239 = vsel %vm237, %v161, 0
    %v242 = vsel %vm237, %v162, 0
    %v245 = vsel %vm237, %v163, 0
    %v248 = vsel %vm237, %v164, 0
    %v251 = vsel %vm237, %v165, 0
    %v254 = vsel %vm237, %v166, 0
    %v257 = vsel %vm237, %v167, 0
    %v260 = vsel %vm237, %v168, 0
    %vm262 = vcmask 1041408
    %v264 = vsel %vm262, %v236, 0
    %266 = vmatprep.subr.bf16.mxu0 0
    %267 = vmatpush1.bf16.msra.mxu0 0
    %268 = vmatprep.subr.bf16.mxu0 0
    %269 = vmatpush1.bf16.msra.mxu0 0
    %270 = vmatprep.subr.bf16.mxu0 0
    %271 = vmatpush1.bf16.msra.mxu0 0
    %272 = vmatprep.subr.bf16.mxu0 0
    %273 = vmatpush1.bf16.msra.mxu0 0
    %274 = vmatprep.subr.bf16.mxu0 0
    %275 = vmatpush1.bf16.msra.mxu0 0
    %276 = vmatprep.subr.bf16.mxu0 0
    %277 = vmatpush1.bf16.msra.mxu0 0
    %278 = vmatprep.subr.bf16.mxu0 0
    %279 = vmatpush1.bf16.msra.mxu0 0
    %280 = vmatprep.subr.bf16.mxu0 0
    %281 = vmatpush1.bf16.msra.mxu0 %v264
    %282 = vmatprep.subr.bf16.mxu0 0
    %283 = vmatpush2.bf16.msra.mxu0 0
    %284 = vmatprep.subr.bf16.mxu0 0
    %285 = vmatpush2.bf16.msra.mxu0 0
    %286 = vmatprep.subr.bf16.mxu0 0
    %287 = vmatpush2.bf16.msra.mxu0 0
    %288 = vmatprep.subr.bf16.mxu0 0
    %289 = vmatpush2.bf16.msra.mxu0 0
    %290 = vmatprep.subr.bf16.mxu0 0
    %291 = vmatpush2.bf16.msra.mxu0 0
    %292 = vmatprep.subr.bf16.mxu0 0
    %293 = vmatpush2.bf16.msra.mxu0 0
    %294 = vmatprep.subr.bf16.mxu0 0
    %295 = vmatpush2.bf16.msra.mxu0 0
    %296 = vmatprep.subr.bf16.mxu0 0
    %297 = vmatpush2.bf16.msra.mxu0 0
    %298 = vmatprep.mubr.bf16.mxu0 0
    %299 = vmatmul.mubr.bf16.gmra.mxu0 %v239
    %v300 = vpop.f32.mrf.mxu0
    %v301 = vadd.f32 0.0, %v300
    %v302 = vpop.f32.mrf.mxu0
    %v303 = vpop.f32.mrf.mxu0
    %v304 = vadd.f32 0.0, %v303
    %v305 = vpop.f32.mrf.mxu0
    %306 = vmatprep.mubr.bf16.mxu0 0
    %307 = vmatmul.mubr.bf16.gmra.mxu0 %v242
    %v308 = vpop.f32.mrf.mxu0
    %v309 = vadd.f32 0.0, %v308
    %v310 = vpop.f32.mrf.mxu0
    %v311 = vpop.f32.mrf.mxu0
    %v312 = vadd.f32 0.0, %v311
    %v313 = vpop.f32.mrf.mxu0
    %314 = vmatprep.mubr.bf16.mxu0 0
    %315 = vmatmul.mubr.bf16.gmra.mxu0 %v245
    %v316 = vpop.f32.mrf.mxu0
    %v317 = vadd.f32 0.0, %v316
    %v318 = vpop.f32.mrf.mxu0
    %v319 = vpop.f32.mrf.mxu0
    %v320 = vadd.f32 0.0, %v319
    %v321 = vpop.f32.mrf.mxu0
    %322 = vmatprep.mubr.bf16.mxu0 0
    %323 = vmatmul.mubr.bf16.gmra.mxu0 %v248
    %v324 = vpop.f32.mrf.mxu0
    %v325 = vadd.f32 0.0, %v324
    %v326 = vpop.f32.mrf.mxu0
    %v327 = vpop.f32.mrf.mxu0
    %v328 = vadd.f32 0.0, %v327
    %v329 = vpop.f32.mrf.mxu0
    %330 = vmatprep.mubr.bf16.mxu0 0
    %331 = vmatmul.mubr.bf16.gmra.mxu0 %v251
    %v332 = vpop.f32.mrf.mxu0
    %v333 = vadd.f32 0.0, %v332
    %v334 = vpop.f32.mrf.mxu0
    %v335 = vpop.f32.mrf.mxu0
    %v336 = vadd.f32 0.0, %v335
    %v337 = vpop.f32.mrf.mxu0
    %338 = vmatprep.mubr.bf16.mxu0 0
    %339 = vmatmul.mubr.bf16.gmra.mxu0 %v254
    %v340 = vpop.f32.mrf.mxu0
    %v341 = vadd.f32 0.0, %v340
    %v342 = vpop.f32.mrf.mxu0
    %v343 = vpop.f32.mrf.mxu0
    %v344 = vadd.f32 0.0, %v343
    %v345 = vpop.f32.mrf.mxu0
    %346 = vmatprep.mubr.bf16.mxu0 0
    %347 = vmatmul.mubr.bf16.gmra.mxu0 %v257
    %v348 = vpop.f32.mrf.mxu0
    %v349 = vadd.f32 0.0, %v348
    %v350 = vpop.f32.mrf.mxu0
    %v351 = vpop.f32.mrf.mxu0
    %v352 = vadd.f32 0.0, %v351
    %v353 = vpop.f32.mrf.mxu0
    %354 = vmatprep.mubr.bf16.mxu0 0
    %355 = vmatmul.mubr.bf16.gmra.mxu0 %v260
    %v356 = vpop.f32.mrf.mxu0
    %v357 = vadd.f32 0.0, %v356
    %v358 = vpop.f32.mrf.mxu0
    %v359 = vpop.f32.mrf.mxu0
    %v360 = vadd.f32 0.0, %v359
    %v361 = vpop.f32.mrf.mxu0
    %362 = vdwg.mxu0
    %v364 = vsel %vm237, %v72, 0
    %v367 = vsel %vm237, %v73, 0
    %v370 = vsel %vm237, %v74, 0
    %v373 = vsel %vm237, %v75, 0
    %v376 = vsel %vm237, %v76, 0
    %v379 = vsel %vm237, %v77, 0
    %v382 = vsel %vm237, %v78, 0
    %v385 = vsel %vm237, %v79, 0
    %v388 = vsel %vm262, %v234, 0
    %390 = vmatprep.subr.bf16.mxu0 0
    %391 = vmatpush1.bf16.msra.mxu0 0
    %392 = vmatprep.subr.bf16.mxu0 0
    %393 = vmatpush1.bf16.msra.mxu0 0
    %394 = vmatprep.subr.bf16.mxu0 0
    %395 = vmatpush1.bf16.msra.mxu0 0
    %396 = vmatprep.subr.bf16.mxu0 0
    %397 = vmatpush1.bf16.msra.mxu0 0
    %398 = vmatprep.subr.bf16.mxu0 0
    %399 = vmatpush1.bf16.msra.mxu0 0
    %400 = vmatprep.subr.bf16.mxu0 0
    %401 = vmatpush1.bf16.msra.mxu0 0
    %402 = vmatprep.subr.bf16.mxu0 0
    %403 = vmatpush1.bf16.msra.mxu0 0
    %404 = vmatprep.subr.bf16.mxu0 0
    %405 = vmatpush1.bf16.msra.mxu0 %v388
    %406 = vmatprep.subr.bf16.mxu0 0
    %407 = vmatpush2.bf16.msra.mxu0 0
    %408 = vmatprep.subr.bf16.mxu0 0
    %409 = vmatpush2.bf16.msra.mxu0 0
    %410 = vmatprep.subr.bf16.mxu0 0
    %411 = vmatpush2.bf16.msra.mxu0 0
    %412 = vmatprep.subr.bf16.mxu0 0
    %413 = vmatpush2.bf16.msra.mxu0 0
    %414 = vmatprep.subr.bf16.mxu0 0
    %415 = vmatpush2.bf16.msra.mxu0 0
    %416 = vmatprep.subr.bf16.mxu0 0
    %417 = vmatpush2.bf16.msra.mxu0 0
    %418 = vmatprep.subr.bf16.mxu0 0
    %419 = vmatpush2.bf16.msra.mxu0 0
    %420 = vmatprep.subr.bf16.mxu0 0
    %421 = vmatpush2.bf16.msra.mxu0 0
    %422 = vmatprep.mubr.bf16.mxu0 0
    %423 = vmatmul.mubr.bf16.gmra.mxu0 %v364
    %v424 = vpop.f32.mrf.mxu0
    %v425 = vadd.f32 %v301, %v424
    %v426 = vpop.f32.mrf.mxu0
    %v427 = vpop.f32.mrf.mxu0
    %v428 = vadd.f32 %v304, %v427
    %v429 = vpop.f32.mrf.mxu0
    %430 = vmatprep.mubr.bf16.mxu0 0
    %431 = vmatmul.mubr.bf16.gmra.mxu0 %v367
    %v432 = vpop.f32.mrf.mxu0
    %v433 = vadd.f32 %v309, %v432
    %v434 = vpop.f32.mrf.mxu0
    %v435 = vpop.f32.mrf.mxu0
    %v436 = vadd.f32 %v312, %v435
    %v437 = vpop.f32.mrf.mxu0
    %438 = vmatprep.mubr.bf16.mxu0 0
    %439 = vmatmul.mubr.bf16.gmra.mxu0 %v370
    %v440 = vpop.f32.mrf.mxu0
    %v441 = vadd.f32 %v317, %v440
    %v442 = vpop.f32.mrf.mxu0
    %v443 = vpop.f32.mrf.mxu0
    %v444 = vadd.f32 %v320, %v443
    %v445 = vpop.f32.mrf.mxu0
    %446 = vmatprep.mubr.bf16.mxu0 0
    %447 = vmatmul.mubr.bf16.gmra.mxu0 %v373
    %v448 = vpop.f32.mrf.mxu0
    %v449 = vadd.f32 %v325, %v448
    %v450 = vpop.f32.mrf.mxu0
    %v451 = vpop.f32.mrf.mxu0
    %v452 = vadd.f32 %v328, %v451
    %v453 = vpop.f32.mrf.mxu0
    %454 = vmatprep.mubr.bf16.mxu0 0
    %455 = vmatmul.mubr.bf16.gmra.mxu0 %v376
    %v456 = vpop.f32.mrf.mxu0
    %v457 = vadd.f32 %v333, %v456
    %v458 = vpop.f32.mrf.mxu0
    %v459 = vpop.f32.mrf.mxu0
    %v460 = vadd.f32 %v336, %v459
    %v461 = vpop.f32.mrf.mxu0
    %462 = vmatprep.mubr.bf16.mxu0 0
    %463 = vmatmul.mubr.bf16.gmra.mxu0 %v379
    %v464 = vpop.f32.mrf.mxu0
    %v465 = vadd.f32 %v341, %v464
    %v466 = vpop.f32.mrf.mxu0
    %v467 = vpop.f32.mrf.mxu0
    %v468 = vadd.f32 %v344, %v467
    %v469 = vpop.f32.mrf.mxu0
    %470 = vmatprep.mubr.bf16.mxu0 0
    %471 = vmatmul.mubr.bf16.gmra.mxu0 %v382
    %v472 = vpop.f32.mrf.mxu0
    %v473 = vadd.f32 %v349, %v472
    %v474 = vpop.f32.mrf.mxu0
    %v475 = vpop.f32.mrf.mxu0
    %v476 = vadd.f32 %v352, %v475
    %v477 = vpop.f32.mrf.mxu0
    %478 = vmatprep.mubr.bf16.mxu0 0
    %479 = vmatmul.mubr.bf16.gmra.mxu0 %v385
    %v480 = vpop.f32.mrf.mxu0
    %v481 = vadd.f32 %v357, %v480
    %v482 = vpop.f32.mrf.mxu0
    %v483 = vpop.f32.mrf.mxu0
    %v484 = vadd.f32 %v360, %v483
    %v485 = vpop.f32.mrf.mxu0
    %486 = vdwg.mxu0
    %s487 = scalar_lea.vmem %s1, 4
    %v488 = vld [vmem:[%s487] sm:$0x3]
    %v490 = vsel %vm237, %v226, 0
    %v493 = vsel %vm237, %v227, 0
    %v496 = vsel %vm237, %v228, 0
    %v499 = vsel %vm237, %v229, 0
    %v502 = vsel %vm237, %v230, 0
    %v505 = vsel %vm237, %v231, 0
    %v508 = vsel %vm237, %v232, 0
    %v511 = vsel %vm237, %v233, 0
    %v514 = vsel %vm262, %v488, 0
    %516 = vmatprep.subr.bf16.mxu0 0
    %517 = vmatpush1.bf16.msra.mxu0 0
    %518 = vmatprep.subr.bf16.mxu0 0
    %519 = vmatpush1.bf16.msra.mxu0 0
    %520 = vmatprep.subr.bf16.mxu0 0
    %521 = vmatpush1.bf16.msra.mxu0 0
    %522 = vmatprep.subr.bf16.mxu0 0
    %523 = vmatpush1.bf16.msra.mxu0 0
    %524 = vmatprep.subr.bf16.mxu0 0
    %525 = vmatpush1.bf16.msra.mxu0 0
    %526 = vmatprep.subr.bf16.mxu0 0
    %527 = vmatpush1.bf16.msra.mxu0 0
    %528 = vmatprep.subr.bf16.mxu0 0
    %529 = vmatpush1.bf16.msra.mxu0 0
    %530 = vmatprep.subr.bf16.mxu0 0
    %531 = vmatpush1.bf16.msra.mxu0 %v514
    %532 = vmatprep.subr.bf16.mxu0 0
    %533 = vmatpush2.bf16.msra.mxu0 0
    %534 = vmatprep.subr.bf16.mxu0 0
    %535 = vmatpush2.bf16.msra.mxu0 0
    %536 = vmatprep.subr.bf16.mxu0 0
    %537 = vmatpush2.bf16.msra.mxu0 0
    %538 = vmatprep.subr.bf16.mxu0 0
    %539 = vmatpush2.bf16.msra.mxu0 0
    %540 = vmatprep.subr.bf16.mxu0 0
    %541 = vmatpush2.bf16.msra.mxu0 0
    %542 = vmatprep.subr.bf16.mxu0 0
    %543 = vmatpush2.bf16.msra.mxu0 0
    %544 = vmatprep.subr.bf16.mxu0 0
    %545 = vmatpush2.bf16.msra.mxu0 0
    %546 = vmatprep.subr.bf16.mxu0 0
    %547 = vmatpush2.bf16.msra.mxu0 0
    %548 = vmatprep.mubr.bf16.mxu0 0
    %549 = vmatmul.mubr.bf16.gmra.mxu0 %v490
    %v550 = vpop.f32.mrf.mxu0
    %v551 = vadd.f32 0.0, %v550
    %v552 = vpop.f32.mrf.mxu0
    %v553 = vpop.f32.mrf.mxu0
    %v554 = vadd.f32 0.0, %v553
    %v555 = vpop.f32.mrf.mxu0
    %556 = vmatprep.mubr.bf16.mxu0 0
    %557 = vmatmul.mubr.bf16.gmra.mxu0 %v493
    %v558 = vpop.f32.mrf.mxu0
    %v559 = vadd.f32 0.0, %v558
    %v560 = vpop.f32.mrf.mxu0
    %v561 = vpop.f32.mrf.mxu0
    %v562 = vadd.f32 0.0, %v561
    %v563 = vpop.f32.mrf.mxu0
    %564 = vmatprep.mubr.bf16.mxu0 0
    %565 = vmatmul.mubr.bf16.gmra.mxu0 %v496
    %v566 = vpop.f32.mrf.mxu0
    %v567 = vadd.f32 0.0, %v566
    %v568 = vpop.f32.mrf.mxu0
    %v569 = vpop.f32.mrf.mxu0
    %v570 = vadd.f32 0.0, %v569
    %v571 = vpop.f32.mrf.mxu0
    %572 = vmatprep.mubr.bf16.mxu0 0
    %573 = vmatmul.mubr.bf16.gmra.mxu0 %v499
    %v574 = vpop.f32.mrf.mxu0
    %v575 = vadd.f32 0.0, %v574
    %v576 = vpop.f32.mrf.mxu0
    %v577 = vpop.f32.mrf.mxu0
    %v578 = vadd.f32 0.0, %v577
    %v579 = vpop.f32.mrf.mxu0
    %580 = vmatprep.mubr.bf16.mxu0 0
    %581 = vmatmul.mubr.bf16.gmra.mxu0 %v502
    %v582 = vpop.f32.mrf.mxu0
    %v583 = vadd.f32 0.0, %v582
    %v584 = vpop.f32.mrf.mxu0
    %v585 = vpop.f32.mrf.mxu0
    %v586 = vadd.f32 0.0, %v585
    %v587 = vpop.f32.mrf.mxu0
    %588 = vmatprep.mubr.bf16.mxu0 0
    %589 = vmatmul.mubr.bf16.gmra.mxu0 %v505
    %v590 = vpop.f32.mrf.mxu0
    %v591 = vadd.f32 0.0, %v590
    %v592 = vpop.f32.mrf.mxu0
    %v593 = vpop.f32.mrf.mxu0
    %v594 = vadd.f32 0.0, %v593
    %v595 = vpop.f32.mrf.mxu0
    %596 = vmatprep.mubr.bf16.mxu0 0
    %597 = vmatmul.mubr.bf16.gmra.mxu0 %v508
    %v598 = vpop.f32.mrf.mxu0
    %v599 = vadd.f32 0.0, %v598
    %v600 = vpop.f32.mrf.mxu0
    %v601 = vpop.f32.mrf.mxu0
    %v602 = vadd.f32 0.0, %v601
    %v603 = vpop.f32.mrf.mxu0
    %604 = vmatprep.mubr.bf16.mxu0 0
    %605 = vmatmul.mubr.bf16.gmra.mxu0 %v511
    %v606 = vpop.f32.mrf.mxu0
    %v607 = vadd.f32 0.0, %v606
    %v608 = vpop.f32.mrf.mxu0
    %v609 = vpop.f32.mrf.mxu0
    %v610 = vadd.f32 0.0, %v609
    %v611 = vpop.f32.mrf.mxu0
    %612 = vdwg.mxu0
    %v613 = vadd.f32 %v425, %v551
    %v614 = vadd.f32 %v428, %v554
    %v615 = vadd.f32 %v433, %v559
    %v616 = vadd.f32 %v436, %v562
    %v617 = vadd.f32 %v441, %v567
    %v618 = vadd.f32 %v444, %v570
    %v619 = vadd.f32 %v449, %v575
    %v620 = vadd.f32 %v452, %v578
    %v621 = vadd.f32 %v457, %v583
    %v622 = vadd.f32 %v460, %v586
    %v623 = vadd.f32 %v465, %v591
    %v624 = vadd.f32 %v468, %v594
    %v625 = vadd.f32 %v473, %v599
    %v626 = vadd.f32 %v476, %v602
    %v627 = vadd.f32 %v481, %v607
    %v628 = vadd.f32 %v484, %v610
    %v629 = vld [vmem:[%s2] sm:$0x1]
    %v631 = vlaneseq
    %v632 = vshrl.u32 %v631, 7
    %v633 = vsub.s32 0, %v632
    %v634 = vrot.slane %v629, %v633
    %v636 = vadd.f32 %v613, %v634
    %v637 = vadd.f32 %v614, %v634
    %v638 = vadd.f32 %v615, %v634
    %v639 = vadd.f32 %v616, %v634
    %v640 = vadd.f32 %v617, %v634
    %v641 = vadd.f32 %v618, %v634
    %v642 = vadd.f32 %v619, %v634
    %v643 = vadd.f32 %v620, %v634
    %v644 = vadd.f32 %v621, %v634
    %v645 = vadd.f32 %v622, %v634
    %v646 = vadd.f32 %v623, %v634
    %v647 = vadd.f32 %v624, %v634
    %v648 = vadd.f32 %v625, %v634
    %v649 = vadd.f32 %v626, %v634
    %v650 = vadd.f32 %v627, %v634
    %v651 = vadd.f32 %v628, %v634
    %v652 = vmax.f32 %v636, 0.0
    %v653 = vmax.f32 %v637, 0.0
    %v654 = vmax.f32 %v638, 0.0
    %v655 = vmax.f32 %v639, 0.0
    %v656 = vmax.f32 %v640, 0.0
    %v657 = vmax.f32 %v641, 0.0
    %v658 = vmax.f32 %v642, 0.0
    %v659 = vmax.f32 %v643, 0.0
    %v660 = vmax.f32 %v644, 0.0
    %v661 = vmax.f32 %v645, 0.0
    %v662 = vmax.f32 %v646, 0.0
    %v663 = vmax.f32 %v647, 0.0
    %v664 = vmax.f32 %v648, 0.0
    %v665 = vmax.f32 %v649, 0.0
    %v666 = vmax.f32 %v650, 0.0
    %v667 = vmax.f32 %v651, 0.0
    %v684 = vcombine.high %v652, %v652
    %v686 = vunpack.c.l.s4 1983009808
    %v687 = vunpack.c.0.s8 %v686
    %v688 = vlaneseq
    %v689 = vshrl.u32 %v688, 7
    %v690 = vsub.s32 %v687, %v689
    %v691 = vrot.slane %v652, %v690
    %v693 = vunpack.c.l.s4 1983009808
    %v694 = vunpack.c.0.s8 %v693
    %v695 = vlaneseq
    %v696 = vshrl.u32 %v695, 7
    %v697 = vsub.s32 %v694, %v696
    %v698 = vrot.slane %v684, %v697
    %v699 = vcombine.high %v691, %v691
    %v700 = vcombine.high %v698, %v698
    %v701 = vcombine.high %v653, %v653
    %v703 = vunpack.c.l.s4 1983009808
    %v704 = vunpack.c.0.s8 %v703
    %v705 = vlaneseq
    %v706 = vshrl.u32 %v705, 7
    %v707 = vsub.s32 %v704, %v706
    %v708 = vrot.slane %v653, %v707
    %v710 = vunpack.c.l.s4 1983009808
    %v711 = vunpack.c.0.s8 %v710
    %v712 = vlaneseq
    %v713 = vshrl.u32 %v712, 7
    %v714 = vsub.s32 %v711, %v713
    %v715 = vrot.slane %v701, %v714
    %v716 = vcombine.high %v708, %v708
    %v717 = vcombine.high %v715, %v715
    %v718 = vcombine.high %v654, %v654
    %v720 = vunpack.c.l.s4 1983009808
    %v721 = vunpack.c.0.s8 %v720
    %v722 = vlaneseq
    %v723 = vshrl.u32 %v722, 7
    %v724 = vsub.s32 %v721, %v723
    %v725 = vrot.slane %v654, %v724
    %v727 = vunpack.c.l.s4 1983009808
    %v728 = vunpack.c.0.s8 %v727
    %v729 = vlaneseq
    %v730 = vshrl.u32 %v729, 7
    %v731 = vsub.s32 %v728, %v730
    %v732 = vrot.slane %v718, %v731
    %v733 = vcombine.high %v725, %v725
    %v734 = vcombine.high %v732, %v732
    %v735 = vcombine.high %v655, %v655
    %v737 = vunpack.c.l.s4 1983009808
    %v738 = vunpack.c.0.s8 %v737
    %v739 = vlaneseq
    %v740 = vshrl.u32 %v739, 7
    %v741 = vsub.s32 %v738, %v740
    %v742 = vrot.slane %v655, %v741
    %v744 = vunpack.c.l.s4 1983009808
    %v745 = vunpack.c.0.s8 %v744
    %v746 = vlaneseq
    %v747 = vshrl.u32 %v746, 7
    %v748 = vsub.s32 %v745, %v747
    %v749 = vrot.slane %v735, %v748
    %v750 = vcombine.high %v742, %v742
    %v751 = vcombine.high %v749, %v749
    %v752 = vcombine.high %v656, %v656
    %v754 = vunpack.c.l.s4 1983009808
    %v755 = vunpack.c.0.s8 %v754
    %v756 = vlaneseq
    %v757 = vshrl.u32 %v756, 7
    %v758 = vsub.s32 %v755, %v757
    %v759 = vrot.slane %v656, %v758
    %v761 = vunpack.c.l.s4 1983009808
    %v762 = vunpack.c.0.s8 %v761
    %v763 = vlaneseq
    %v764 = vshrl.u32 %v763, 7
    %v765 = vsub.s32 %v762, %v764
    %v766 = vrot.slane %v752, %v765
    %v767 = vcombine.high %v759, %v759
    %v768 = vcombine.high %v766, %v766
    %v769 = vcombine.high %v657, %v657
    %v771 = vunpack.c.l.s4 1983009808
    %v772 = vunpack.c.0.s8 %v771
    %v773 = vlaneseq
    %v774 = vshrl.u32 %v773, 7
    %v775 = vsub.s32 %v772, %v774
    %v776 = vrot.slane %v657, %v775
    %v778 = vunpack.c.l.s4 1983009808
    %v779 = vunpack.c.0.s8 %v778
    %v780 = vlaneseq
    %v781 = vshrl.u32 %v780, 7
    %v782 = vsub.s32 %v779, %v781
    %v783 = vrot.slane %v769, %v782
    %v784 = vcombine.high %v776, %v776
    %v785 = vcombine.high %v783, %v783
    %v786 = vcombine.high %v658, %v658
    %v788 = vunpack.c.l.s4 1983009808
    %v789 = vunpack.c.0.s8 %v788
    %v790 = vlaneseq
    %v791 = vshrl.u32 %v790, 7
    %v792 = vsub.s32 %v789, %v791
    %v793 = vrot.slane %v658, %v792
    %v795 = vunpack.c.l.s4 1983009808
    %v796 = vunpack.c.0.s8 %v795
    %v797 = vlaneseq
    %v798 = vshrl.u32 %v797, 7
    %v799 = vsub.s32 %v796, %v798
    %v800 = vrot.slane %v786, %v799
    %v801 = vcombine.high %v793, %v793
    %v802 = vcombine.high %v800, %v800
    %v803 = vcombine.high %v659, %v659
    %v805 = vunpack.c.l.s4 1983009808
    %v806 = vunpack.c.0.s8 %v805
    %v807 = vlaneseq
    %v808 = vshrl.u32 %v807, 7
    %v809 = vsub.s32 %v806, %v808
    %v810 = vrot.slane %v659, %v809
    %v812 = vunpack.c.l.s4 1983009808
    %v813 = vunpack.c.0.s8 %v812
    %v814 = vlaneseq
    %v815 = vshrl.u32 %v814, 7
    %v816 = vsub.s32 %v813, %v815
    %v817 = vrot.slane %v803, %v816
    %v818 = vcombine.high %v810, %v810
    %v819 = vcombine.high %v817, %v817
    %v820 = vcombine.high %v660, %v660
    %v822 = vunpack.c.l.s4 1983009808
    %v823 = vunpack.c.0.s8 %v822
    %v824 = vlaneseq
    %v825 = vshrl.u32 %v824, 7
    %v826 = vsub.s32 %v823, %v825
    %v827 = vrot.slane %v660, %v826
    %v829 = vunpack.c.l.s4 1983009808
    %v830 = vunpack.c.0.s8 %v829
    %v831 = vlaneseq
    %v832 = vshrl.u32 %v831, 7
    %v833 = vsub.s32 %v830, %v832
    %v834 = vrot.slane %v820, %v833
    %v835 = vcombine.high %v827, %v827
    %v836 = vcombine.high %v834, %v834
    %v837 = vcombine.high %v661, %v661
    %v839 = vunpack.c.l.s4 1983009808
    %v840 = vunpack.c.0.s8 %v839
    %v841 = vlaneseq
    %v842 = vshrl.u32 %v841, 7
    %v843 = vsub.s32 %v840, %v842
    %v844 = vrot.slane %v661, %v843
    %v846 = vunpack.c.l.s4 1983009808
    %v847 = vunpack.c.0.s8 %v846
    %v848 = vlaneseq
    %v849 = vshrl.u32 %v848, 7
    %v850 = vsub.s32 %v847, %v849
    %v851 = vrot.slane %v837, %v850
    %v852 = vcombine.high %v844, %v844
    %v853 = vcombine.high %v851, %v851
    %v854 = vcombine.high %v662, %v662
    %v856 = vunpack.c.l.s4 1983009808
    %v857 = vunpack.c.0.s8 %v856
    %v858 = vlaneseq
    %v859 = vshrl.u32 %v858, 7
    %v860 = vsub.s32 %v857, %v859
    %v861 = vrot.slane %v662, %v860
    %v863 = vunpack.c.l.s4 1983009808
    %v864 = vunpack.c.0.s8 %v863
    %v865 = vlaneseq
    %v866 = vshrl.u32 %v865, 7
    %v867 = vsub.s32 %v864, %v866
    %v868 = vrot.slane %v854, %v867
    %v869 = vcombine.high %v861, %v861
    %v870 = vcombine.high %v868, %v868
    %v871 = vcombine.high %v663, %v663
    %v873 = vunpack.c.l.s4 1983009808
    %v874 = vunpack.c.0.s8 %v873
    %v875 = vlaneseq
    %v876 = vshrl.u32 %v875, 7
    %v877 = vsub.s32 %v874, %v876
    %v878 = vrot.slane %v663, %v877
    %v880 = vunpack.c.l.s4 1983009808
    %v881 = vunpack.c.0.s8 %v880
    %v882 = vlaneseq
    %v883 = vshrl.u32 %v882, 7
    %v884 = vsub.s32 %v881, %v883
    %v885 = vrot.slane %v871, %v884
    %v886 = vcombine.high %v878, %v878
    %v887 = vcombine.high %v885, %v885
    %v888 = vcombine.high %v664, %v664
    %v890 = vunpack.c.l.s4 1983009808
    %v891 = vunpack.c.0.s8 %v890
    %v892 = vlaneseq
    %v893 = vshrl.u32 %v892, 7
    %v894 = vsub.s32 %v891, %v893
    %v895 = vrot.slane %v664, %v894
    %v897 = vunpack.c.l.s4 1983009808
    %v898 = vunpack.c.0.s8 %v897
    %v899 = vlaneseq
    %v900 = vshrl.u32 %v899, 7
    %v901 = vsub.s32 %v898, %v900
    %v902 = vrot.slane %v888, %v901
    %v903 = vcombine.high %v895, %v895
    %v904 = vcombine.high %v902, %v902
    %v905 = vcombine.high %v665, %v665
    %v907 = vunpack.c.l.s4 1983009808
    %v908 = vunpack.c.0.s8 %v907
    %v909 = vlaneseq
    %v910 = vshrl.u32 %v909, 7
    %v911 = vsub.s32 %v908, %v910
    %v912 = vrot.slane %v665, %v911
    %v914 = vunpack.c.l.s4 1983009808
    %v915 = vunpack.c.0.s8 %v914
    %v916 = vlaneseq
    %v917 = vshrl.u32 %v916, 7
    %v918 = vsub.s32 %v915, %v917
    %v919 = vrot.slane %v905, %v918
    %v920 = vcombine.high %v912, %v912
    %v921 = vcombine.high %v919, %v919
    %v922 = vcombine.high %v666, %v666
    %v924 = vunpack.c.l.s4 1983009808
    %v925 = vunpack.c.0.s8 %v924
    %v926 = vlaneseq
    %v927 = vshrl.u32 %v926, 7
    %v928 = vsub.s32 %v925, %v927
    %v929 = vrot.slane %v666, %v928
    %v931 = vunpack.c.l.s4 1983009808
    %v932 = vunpack.c.0.s8 %v931
    %v933 = vlaneseq
    %v934 = vshrl.u32 %v933, 7
    %v935 = vsub.s32 %v932, %v934
    %v936 = vrot.slane %v922, %v935
    %v937 = vcombine.high %v929, %v929
    %v938 = vcombine.high %v936, %v936
    %v939 = vcombine.high %v667, %v667
    %v941 = vunpack.c.l.s4 1983009808
    %v942 = vunpack.c.0.s8 %v941
    %v943 = vlaneseq
    %v944 = vshrl.u32 %v943, 7
    %v945 = vsub.s32 %v942, %v944
    %v946 = vrot.slane %v667, %v945
    %v948 = vunpack.c.l.s4 1983009808
    %v949 = vunpack.c.0.s8 %v948
    %v950 = vlaneseq
    %v951 = vshrl.u32 %v950, 7
    %v952 = vsub.s32 %v949, %v951
    %v953 = vrot.slane %v939, %v952
    %v954 = vcombine.high %v946, %v946
    %v955 = vcombine.high %v953, %v953
    %vm1020 = vcmask 517120
    %v1021 = vsel %vm1020, %v691, -inf
    %v1022 = vrot.slane %v1021, 4
    %v1023 = vmax.f32 %v1021, %v1022
    %v1024 = vrot.slane %v1023, 2
    %v1025 = vmax.f32 %v1023, %v1024
    %v1026 = vrot.slane %v1025, 1
    %v1027 = vmax.f32 %v1025, %v1026
    %v1028 = vsel %vm1020, %v699, -inf
    %v1029 = vrot.slane %v1028, 4
    %v1030 = vmax.f32 %v1028, %v1029
    %v1031 = vrot.slane %v1030, 2
    %v1032 = vmax.f32 %v1030, %v1031
    %v1033 = vrot.slane %v1032, 1
    %v1034 = vmax.f32 %v1032, %v1033
    %v1035 = vsel %vm1020, %v698, -inf
    %v1036 = vrot.slane %v1035, 4
    %v1037 = vmax.f32 %v1035, %v1036
    %v1038 = vrot.slane %v1037, 2
    %v1039 = vmax.f32 %v1037, %v1038
    %v1040 = vrot.slane %v1039, 1
    %v1041 = vmax.f32 %v1039, %v1040
    %v1042 = vsel %vm1020, %v700, -inf
    %v1043 = vrot.slane %v1042, 4
    %v1044 = vmax.f32 %v1042, %v1043
    %v1045 = vrot.slane %v1044, 2
    %v1046 = vmax.f32 %v1044, %v1045
    %v1047 = vrot.slane %v1046, 1
    %v1048 = vmax.f32 %v1046, %v1047
    %v1049 = vsel %vm1020, %v708, -inf
    %v1050 = vrot.slane %v1049, 4
    %v1051 = vmax.f32 %v1049, %v1050
    %v1052 = vrot.slane %v1051, 2
    %v1053 = vmax.f32 %v1051, %v1052
    %v1054 = vrot.slane %v1053, 1
    %v1055 = vmax.f32 %v1053, %v1054
    %v1056 = vsel %vm1020, %v716, -inf
    %v1057 = vrot.slane %v1056, 4
    %v1058 = vmax.f32 %v1056, %v1057
    %v1059 = vrot.slane %v1058, 2
    %v1060 = vmax.f32 %v1058, %v1059
    %v1061 = vrot.slane %v1060, 1
    %v1062 = vmax.f32 %v1060, %v1061
    %v1063 = vsel %vm1020, %v715, -inf
    %v1064 = vrot.slane %v1063, 4
    %v1065 = vmax.f32 %v1063, %v1064
    %v1066 = vrot.slane %v1065, 2
    %v1067 = vmax.f32 %v1065, %v1066
    %v1068 = vrot.slane %v1067, 1
    %v1069 = vmax.f32 %v1067, %v1068
    %v1070 = vsel %vm1020, %v717, -inf
    %v1071 = vrot.slane %v1070, 4
    %v1072 = vmax.f32 %v1070, %v1071
    %v1073 = vrot.slane %v1072, 2
    %v1074 = vmax.f32 %v1072, %v1073
    %v1075 = vrot.slane %v1074, 1
    %v1076 = vmax.f32 %v1074, %v1075
    %v1077 = vsel %vm1020, %v725, -inf
    %v1078 = vrot.slane %v1077, 4
    %v1079 = vmax.f32 %v1077, %v1078
    %v1080 = vrot.slane %v1079, 2
    %v1081 = vmax.f32 %v1079, %v1080
    %v1082 = vrot.slane %v1081, 1
    %v1083 = vmax.f32 %v1081, %v1082
    %v1084 = vsel %vm1020, %v733, -inf
    %v1085 = vrot.slane %v1084, 4
    %v1086 = vmax.f32 %v1084, %v1085
    %v1087 = vrot.slane %v1086, 2
    %v1088 = vmax.f32 %v1086, %v1087
    %v1089 = vrot.slane %v1088, 1
    %v1090 = vmax.f32 %v1088, %v1089
    %v1091 = vsel %vm1020, %v732, -inf
    %v1092 = vrot.slane %v1091, 4
    %v1093 = vmax.f32 %v1091, %v1092
    %v1094 = vrot.slane %v1093, 2
    %v1095 = vmax.f32 %v1093, %v1094
    %v1096 = vrot.slane %v1095, 1
    %v1097 = vmax.f32 %v1095, %v1096
    %v1098 = vsel %vm1020, %v734, -inf
    %v1099 = vrot.slane %v1098, 4
    %v1100 = vmax.f32 %v1098, %v1099
    %v1101 = vrot.slane %v1100, 2
    %v1102 = vmax.f32 %v1100, %v1101
    %v1103 = vrot.slane %v1102, 1
    %v1104 = vmax.f32 %v1102, %v1103
    %v1105 = vsel %vm1020, %v742, -inf
    %v1106 = vrot.slane %v1105, 4
    %v1107 = vmax.f32 %v1105, %v1106
    %v1108 = vrot.slane %v1107, 2
    %v1109 = vmax.f32 %v1107, %v1108
    %v1110 = vrot.slane %v1109, 1
    %v1111 = vmax.f32 %v1109, %v1110
    %v1112 = vsel %vm1020, %v750, -inf
    %v1113 = vrot.slane %v1112, 4
    %v1114 = vmax.f32 %v1112, %v1113
    %v1115 = vrot.slane %v1114, 2
    %v1116 = vmax.f32 %v1114, %v1115
    %v1117 = vrot.slane %v1116, 1
    %v1118 = vmax.f32 %v1116, %v1117
    %v1119 = vsel %vm1020, %v749, -inf
    %v1120 = vrot.slane %v1119, 4
    %v1121 = vmax.f32 %v1119, %v1120
    %v1122 = vrot.slane %v1121, 2
    %v1123 = vmax.f32 %v1121, %v1122
    %v1124 = vrot.slane %v1123, 1
    %v1125 = vmax.f32 %v1123, %v1124
    %v1126 = vsel %vm1020, %v751, -inf
    %v1127 = vrot.slane %v1126, 4
    %v1128 = vmax.f32 %v1126, %v1127
    %v1129 = vrot.slane %v1128, 2
    %v1130 = vmax.f32 %v1128, %v1129
    %v1131 = vrot.slane %v1130, 1
    %v1132 = vmax.f32 %v1130, %v1131
    %v1133 = vsel %vm1020, %v759, -inf
    %v1134 = vrot.slane %v1133, 4
    %v1135 = vmax.f32 %v1133, %v1134
    %v1136 = vrot.slane %v1135, 2
    %v1137 = vmax.f32 %v1135, %v1136
    %v1138 = vrot.slane %v1137, 1
    %v1139 = vmax.f32 %v1137, %v1138
    %v1140 = vsel %vm1020, %v767, -inf
    %v1141 = vrot.slane %v1140, 4
    %v1142 = vmax.f32 %v1140, %v1141
    %v1143 = vrot.slane %v1142, 2
    %v1144 = vmax.f32 %v1142, %v1143
    %v1145 = vrot.slane %v1144, 1
    %v1146 = vmax.f32 %v1144, %v1145
    %v1147 = vsel %vm1020, %v766, -inf
    %v1148 = vrot.slane %v1147, 4
    %v1149 = vmax.f32 %v1147, %v1148
    %v1150 = vrot.slane %v1149, 2
    %v1151 = vmax.f32 %v1149, %v1150
    %v1152 = vrot.slane %v1151, 1
    %v1153 = vmax.f32 %v1151, %v1152
    %v1154 = vsel %vm1020, %v768, -inf
    %v1155 = vrot.slane %v1154, 4
    %v1156 = vmax.f32 %v1154, %v1155
    %v1157 = vrot.slane %v1156, 2
    %v1158 = vmax.f32 %v1156, %v1157
    %v1159 = vrot.slane %v1158, 1
    %v1160 = vmax.f32 %v1158, %v1159
    %v1161 = vsel %vm1020, %v776, -inf
    %v1162 = vrot.slane %v1161, 4
    %v1163 = vmax.f32 %v1161, %v1162
    %v1164 = vrot.slane %v1163, 2
    %v1165 = vmax.f32 %v1163, %v1164
    %v1166 = vrot.slane %v1165, 1
    %v1167 = vmax.f32 %v1165, %v1166
    %v1168 = vsel %vm1020, %v784, -inf
    %v1169 = vrot.slane %v1168, 4
    %v1170 = vmax.f32 %v1168, %v1169
    %v1171 = vrot.slane %v1170, 2
    %v1172 = vmax.f32 %v1170, %v1171
    %v1173 = vrot.slane %v1172, 1
    %v1174 = vmax.f32 %v1172, %v1173
    %v1175 = vsel %vm1020, %v783, -inf
    %v1176 = vrot.slane %v1175, 4
    %v1177 = vmax.f32 %v1175, %v1176
    %v1178 = vrot.slane %v1177, 2
    %v1179 = vmax.f32 %v1177, %v1178
    %v1180 = vrot.slane %v1179, 1
    %v1181 = vmax.f32 %v1179, %v1180
    %v1182 = vsel %vm1020, %v785, -inf
    %v1183 = vrot.slane %v1182, 4
    %v1184 = vmax.f32 %v1182, %v1183
    %v1185 = vrot.slane %v1184, 2
    %v1186 = vmax.f32 %v1184, %v1185
    %v1187 = vrot.slane %v1186, 1
    %v1188 = vmax.f32 %v1186, %v1187
    %v1189 = vsel %vm1020, %v793, -inf
    %v1190 = vrot.slane %v1189, 4
    %v1191 = vmax.f32 %v1189, %v1190
    %v1192 = vrot.slane %v1191, 2
    %v1193 = vmax.f32 %v1191, %v1192
    %v1194 = vrot.slane %v1193, 1
    %v1195 = vmax.f32 %v1193, %v1194
    %v1196 = vsel %vm1020, %v801, -inf
    %v1197 = vrot.slane %v1196, 4
    %v1198 = vmax.f32 %v1196, %v1197
    %v1199 = vrot.slane %v1198, 2
    %v1200 = vmax.f32 %v1198, %v1199
    %v1201 = vrot.slane %v1200, 1
    %v1202 = vmax.f32 %v1200, %v1201
    %v1203 = vsel %vm1020, %v800, -inf
    %v1204 = vrot.slane %v1203, 4
    %v1205 = vmax.f32 %v1203, %v1204
    %v1206 = vrot.slane %v1205, 2
    %v1207 = vmax.f32 %v1205, %v1206
    %v1208 = vrot.slane %v1207, 1
    %v1209 = vmax.f32 %v1207, %v1208
    %v1210 = vsel %vm1020, %v802, -inf
    %v1211 = vrot.slane %v1210, 4
    %v1212 = vmax.f32 %v1210, %v1211
    %v1213 = vrot.slane %v1212, 2
    %v1214 = vmax.f32 %v1212, %v1213
    %v1215 = vrot.slane %v1214, 1
    %v1216 = vmax.f32 %v1214, %v1215
    %v1217 = vsel %vm1020, %v810, -inf
    %v1218 = vrot.slane %v1217, 4
    %v1219 = vmax.f32 %v1217, %v1218
    %v1220 = vrot.slane %v1219, 2
    %v1221 = vmax.f32 %v1219, %v1220
    %v1222 = vrot.slane %v1221, 1
    %v1223 = vmax.f32 %v1221, %v1222
    %v1224 = vsel %vm1020, %v818, -inf
    %v1225 = vrot.slane %v1224, 4
    %v1226 = vmax.f32 %v1224, %v1225
    %v1227 = vrot.slane %v1226, 2
    %v1228 = vmax.f32 %v1226, %v1227
    %v1229 = vrot.slane %v1228, 1
    %v1230 = vmax.f32 %v1228, %v1229
    %v1231 = vsel %vm1020, %v817, -inf
    %v1232 = vrot.slane %v1231, 4
    %v1233 = vmax.f32 %v1231, %v1232
    %v1234 = vrot.slane %v1233, 2
    %v1235 = vmax.f32 %v1233, %v1234
    %v1236 = vrot.slane %v1235, 1
    %v1237 = vmax.f32 %v1235, %v1236
    %v1238 = vsel %vm1020, %v819, -inf
    %v1239 = vrot.slane %v1238, 4
    %v1240 = vmax.f32 %v1238, %v1239
    %v1241 = vrot.slane %v1240, 2
    %v1242 = vmax.f32 %v1240, %v1241
    %v1243 = vrot.slane %v1242, 1
    %v1244 = vmax.f32 %v1242, %v1243
    %v1245 = vsel %vm1020, %v827, -inf
    %v1246 = vrot.slane %v1245, 4
    %v1247 = vmax.f32 %v1245, %v1246
    %v1248 = vrot.slane %v1247, 2
    %v1249 = vmax.f32 %v1247, %v1248
    %v1250 = vrot.slane %v1249, 1
    %v1251 = vmax.f32 %v1249, %v1250
    %v1252 = vsel %vm1020, %v835, -inf
    %v1253 = vrot.slane %v1252, 4
    %v1254 = vmax.f32 %v1252, %v1253
    %v1255 = vrot.slane %v1254, 2
    %v1256 = vmax.f32 %v1254, %v1255
    %v1257 = vrot.slane %v1256, 1
    %v1258 = vmax.f32 %v1256, %v1257
    %v1259 = vsel %vm1020, %v834, -inf
    %v1260 = vrot.slane %v1259, 4
    %v1261 = vmax.f32 %v1259, %v1260
    %v1262 = vrot.slane %v1261, 2
    %v1263 = vmax.f32 %v1261, %v1262
    %v1264 = vrot.slane %v1263, 1
    %v1265 = vmax.f32 %v1263, %v1264
    %v1266 = vsel %vm1020, %v836, -inf
    %v1267 = vrot.slane %v1266, 4
    %v1268 = vmax.f32 %v1266, %v1267
    %v1269 = vrot.slane %v1268, 2
    %v1270 = vmax.f32 %v1268, %v1269
    %v1271 = vrot.slane %v1270, 1
    %v1272 = vmax.f32 %v1270, %v1271
    %v1273 = vsel %vm1020, %v844, -inf
    %v1274 = vrot.slane %v1273, 4
    %v1275 = vmax.f32 %v1273, %v1274
    %v1276 = vrot.slane %v1275, 2
    %v1277 = vmax.f32 %v1275, %v1276
    %v1278 = vrot.slane %v1277, 1
    %v1279 = vmax.f32 %v1277, %v1278
    %v1280 = vsel %vm1020, %v852, -inf
    %v1281 = vrot.slane %v1280, 4
    %v1282 = vmax.f32 %v1280, %v1281
    %v1283 = vrot.slane %v1282, 2
    %v1284 = vmax.f32 %v1282, %v1283
    %v1285 = vrot.slane %v1284, 1
    %v1286 = vmax.f32 %v1284, %v1285
    %v1287 = vsel %vm1020, %v851, -inf
    %v1288 = vrot.slane %v1287, 4
    %v1289 = vmax.f32 %v1287, %v1288
    %v1290 = vrot.slane %v1289, 2
    %v1291 = vmax.f32 %v1289, %v1290
    %v1292 = vrot.slane %v1291, 1
    %v1293 = vmax.f32 %v1291, %v1292
    %v1294 = vsel %vm1020, %v853, -inf
    %v1295 = vrot.slane %v1294, 4
    %v1296 = vmax.f32 %v1294, %v1295
    %v1297 = vrot.slane %v1296, 2
    %v1298 = vmax.f32 %v1296, %v1297
    %v1299 = vrot.slane %v1298, 1
    %v1300 = vmax.f32 %v1298, %v1299
    %v1301 = vsel %vm1020, %v861, -inf
    %v1302 = vrot.slane %v1301, 4
    %v1303 = vmax.f32 %v1301, %v1302
    %v1304 = vrot.slane %v1303, 2
    %v1305 = vmax.f32 %v1303, %v1304
    %v1306 = vrot.slane %v1305, 1
    %v1307 = vmax.f32 %v1305, %v1306
    %v1308 = vsel %vm1020, %v869, -inf
    %v1309 = vrot.slane %v1308, 4
    %v1310 = vmax.f32 %v1308, %v1309
    %v1311 = vrot.slane %v1310, 2
    %v1312 = vmax.f32 %v1310, %v1311
    %v1313 = vrot.slane %v1312, 1
    %v1314 = vmax.f32 %v1312, %v1313
    %v1315 = vsel %vm1020, %v868, -inf
    %v1316 = vrot.slane %v1315, 4
    %v1317 = vmax.f32 %v1315, %v1316
    %v1318 = vrot.slane %v1317, 2
    %v1319 = vmax.f32 %v1317, %v1318
    %v1320 = vrot.slane %v1319, 1
    %v1321 = vmax.f32 %v1319, %v1320
    %v1322 = vsel %vm1020, %v870, -inf
    %v1323 = vrot.slane %v1322, 4
    %v1324 = vmax.f32 %v1322, %v1323
    %v1325 = vrot.slane %v1324, 2
    %v1326 = vmax.f32 %v1324, %v1325
    %v1327 = vrot.slane %v1326, 1
    %v1328 = vmax.f32 %v1326, %v1327
    %v1329 = vsel %vm1020, %v878, -inf
    %v1330 = vrot.slane %v1329, 4
    %v1331 = vmax.f32 %v1329, %v1330
    %v1332 = vrot.slane %v1331, 2
    %v1333 = vmax.f32 %v1331, %v1332
    %v1334 = vrot.slane %v1333, 1
    %v1335 = vmax.f32 %v1333, %v1334
    %v1336 = vsel %vm1020, %v886, -inf
    %v1337 = vrot.slane %v1336, 4
    %v1338 = vmax.f32 %v1336, %v1337
    %v1339 = vrot.slane %v1338, 2
    %v1340 = vmax.f32 %v1338, %v1339
    %v1341 = vrot.slane %v1340, 1
    %v1342 = vmax.f32 %v1340, %v1341
    %v1343 = vsel %vm1020, %v885, -inf
    %v1344 = vrot.slane %v1343, 4
    %v1345 = vmax.f32 %v1343, %v1344
    %v1346 = vrot.slane %v1345, 2
    %v1347 = vmax.f32 %v1345, %v1346
    %v1348 = vrot.slane %v1347, 1
    %v1349 = vmax.f32 %v1347, %v1348
    %v1350 = vsel %vm1020, %v887, -inf
    %v1351 = vrot.slane %v1350, 4
    %v1352 = vmax.f32 %v1350, %v1351
    %v1353 = vrot.slane %v1352, 2
    %v1354 = vmax.f32 %v1352, %v1353
    %v1355 = vrot.slane %v1354, 1
    %v1356 = vmax.f32 %v1354, %v1355
    %v1357 = vsel %vm1020, %v895, -inf
    %v1358 = vrot.slane %v1357, 4
    %v1359 = vmax.f32 %v1357, %v1358
    %v1360 = vrot.slane %v1359, 2
    %v1361 = vmax.f32 %v1359, %v1360
    %v1362 = vrot.slane %v1361, 1
    %v1363 = vmax.f32 %v1361, %v1362
    %v1364 = vsel %vm1020, %v903, -inf
    %v1365 = vrot.slane %v1364, 4
    %v1366 = vmax.f32 %v1364, %v1365
    %v1367 = vrot.slane %v1366, 2
    %v1368 = vmax.f32 %v1366, %v1367
    %v1369 = vrot.slane %v1368, 1
    %v1370 = vmax.f32 %v1368, %v1369
    %v1371 = vsel %vm1020, %v902, -inf
    %v1372 = vrot.slane %v1371, 4
    %v1373 = vmax.f32 %v1371, %v1372
    %v1374 = vrot.slane %v1373, 2
    %v1375 = vmax.f32 %v1373, %v1374
    %v1376 = vrot.slane %v1375, 1
    %v1377 = vmax.f32 %v1375, %v1376
    %v1378 = vsel %vm1020, %v904, -inf
    %v1379 = vrot.slane %v1378, 4
    %v1380 = vmax.f32 %v1378, %v1379
    %v1381 = vrot.slane %v1380, 2
    %v1382 = vmax.f32 %v1380, %v1381
    %v1383 = vrot.slane %v1382, 1
    %v1384 = vmax.f32 %v1382, %v1383
    %v1385 = vsel %vm1020, %v912, -inf
    %v1386 = vrot.slane %v1385, 4
    %v1387 = vmax.f32 %v1385, %v1386
    %v1388 = vrot.slane %v1387, 2
    %v1389 = vmax.f32 %v1387, %v1388
    %v1390 = vrot.slane %v1389, 1
    %v1391 = vmax.f32 %v1389, %v1390
    %v1392 = vsel %vm1020, %v920, -inf
    %v1393 = vrot.slane %v1392, 4
    %v1394 = vmax.f32 %v1392, %v1393
    %v1395 = vrot.slane %v1394, 2
    %v1396 = vmax.f32 %v1394, %v1395
    %v1397 = vrot.slane %v1396, 1
    %v1398 = vmax.f32 %v1396, %v1397
    %v1399 = vsel %vm1020, %v919, -inf
    %v1400 = vrot.slane %v1399, 4
    %v1401 = vmax.f32 %v1399, %v1400
    %v1402 = vrot.slane %v1401, 2
    %v1403 = vmax.f32 %v1401, %v1402
    %v1404 = vrot.slane %v1403, 1
    %v1405 = vmax.f32 %v1403, %v1404
    %v1406 = vsel %vm1020, %v921, -inf
    %v1407 = vrot.slane %v1406, 4
    %v1408 = vmax.f32 %v1406, %v1407
    %v1409 = vrot.slane %v1408, 2
    %v1410 = vmax.f32 %v1408, %v1409
    %v1411 = vrot.slane %v1410, 1
    %v1412 = vmax.f32 %v1410, %v1411
    %v1413 = vsel %vm1020, %v929, -inf
    %v1414 = vrot.slane %v1413, 4
    %v1415 = vmax.f32 %v1413, %v1414
    %v1416 = vrot.slane %v1415, 2
    %v1417 = vmax.f32 %v1415, %v1416
    %v1418 = vrot.slane %v1417, 1
    %v1419 = vmax.f32 %v1417, %v1418
    %v1420 = vsel %vm1020, %v937, -inf
    %v1421 = vrot.slane %v1420, 4
    %v1422 = vmax.f32 %v1420, %v1421
    %v1423 = vrot.slane %v1422, 2
    %v1424 = vmax.f32 %v1422, %v1423
    %v1425 = vrot.slane %v1424, 1
    %v1426 = vmax.f32 %v1424, %v1425
    %v1427 = vsel %vm1020, %v936, -inf
    %v1428 = vrot.slane %v1427, 4
    %v1429 = vmax.f32 %v1427, %v1428
    %v1430 = vrot.slane %v1429, 2
    %v1431 = vmax.f32 %v1429, %v1430
    %v1432 = vrot.slane %v1431, 1
    %v1433 = vmax.f32 %v1431, %v1432
    %v1434 = vsel %vm1020, %v938, -inf
    %v1435 = vrot.slane %v1434, 4
    %v1436 = vmax.f32 %v1434, %v1435
    %v1437 = vrot.slane %v1436, 2
    %v1438 = vmax.f32 %v1436, %v1437
    %v1439 = vrot.slane %v1438, 1
    %v1440 = vmax.f32 %v1438, %v1439
    %v1441 = vsel %vm1020, %v946, -inf
    %v1442 = vrot.slane %v1441, 4
    %v1443 = vmax.f32 %v1441, %v1442
    %v1444 = vrot.slane %v1443, 2
    %v1445 = vmax.f32 %v1443, %v1444
    %v1446 = vrot.slane %v1445, 1
    %v1447 = vmax.f32 %v1445, %v1446
    %v1448 = vsel %vm1020, %v954, -inf
    %v1449 = vrot.slane %v1448, 4
    %v1450 = vmax.f32 %v1448, %v1449
    %v1451 = vrot.slane %v1450, 2
    %v1452 = vmax.f32 %v1450, %v1451
    %v1453 = vrot.slane %v1452, 1
    %v1454 = vmax.f32 %v1452, %v1453
    %v1455 = vsel %vm1020, %v953, -inf
    %v1456 = vrot.slane %v1455, 4
    %v1457 = vmax.f32 %v1455, %v1456
    %v1458 = vrot.slane %v1457, 2
    %v1459 = vmax.f32 %v1457, %v1458
    %v1460 = vrot.slane %v1459, 1
    %v1461 = vmax.f32 %v1459, %v1460
    %v1462 = vsel %vm1020, %v955, -inf
    %v1463 = vrot.slane %v1462, 4
    %v1464 = vmax.f32 %v1462, %v1463
    %v1465 = vrot.slane %v1464, 2
    %v1466 = vmax.f32 %v1464, %v1465
    %v1467 = vrot.slane %v1466, 1
    %v1468 = vmax.f32 %v1466, %v1467
    %v1469 = vpack.c.bf16 %v1027, %v1027
    %v1470 = vpack.c.bf16 %v1034, %v1034
    %v1471 = vpack.c.bf16 %v1041, %v1041
    %v1472 = vpack.c.bf16 %v1048, %v1048
    %v1473 = vpack.c.bf16 %v1055, %v1055
    %v1474 = vpack.c.bf16 %v1062, %v1062
    %v1475 = vpack.c.bf16 %v1069, %v1069
    %v1476 = vpack.c.bf16 %v1076, %v1076
    %v1477 = vpack.c.bf16 %v1083, %v1083
    %v1478 = vpack.c.bf16 %v1090, %v1090
    %v1479 = vpack.c.bf16 %v1097, %v1097
    %v1480 = vpack.c.bf16 %v1104, %v1104
    %v1481 = vpack.c.bf16 %v1111, %v1111
    %v1482 = vpack.c.bf16 %v1118, %v1118
    %v1483 = vpack.c.bf16 %v1125, %v1125
    %v1484 = vpack.c.bf16 %v1132, %v1132
    %v1485 = vpack.c.bf16 %v1139, %v1139
    %v1486 = vpack.c.bf16 %v1146, %v1146
    %v1487 = vpack.c.bf16 %v1153, %v1153
    %v1488 = vpack.c.bf16 %v1160, %v1160
    %v1489 = vpack.c.bf16 %v1167, %v1167
    %v1490 = vpack.c.bf16 %v1174, %v1174
    %v1491 = vpack.c.bf16 %v1181, %v1181
    %v1492 = vpack.c.bf16 %v1188, %v1188
    %v1493 = vpack.c.bf16 %v1195, %v1195
    %v1494 = vpack.c.bf16 %v1202, %v1202
    %v1495 = vpack.c.bf16 %v1209, %v1209
    %v1496 = vpack.c.bf16 %v1216, %v1216
    %v1497 = vpack.c.bf16 %v1223, %v1223
    %v1498 = vpack.c.bf16 %v1230, %v1230
    %v1499 = vpack.c.bf16 %v1237, %v1237
    %v1500 = vpack.c.bf16 %v1244, %v1244
    %v1501 = vpack.c.bf16 %v1251, %v1251
    %v1502 = vpack.c.bf16 %v1258, %v1258
    %v1503 = vpack.c.bf16 %v1265, %v1265
    %v1504 = vpack.c.bf16 %v1272, %v1272
    %v1505 = vpack.c.bf16 %v1279, %v1279
    %v1506 = vpack.c.bf16 %v1286, %v1286
    %v1507 = vpack.c.bf16 %v1293, %v1293
    %v1508 = vpack.c.bf16 %v1300, %v1300
    %v1509 = vpack.c.bf16 %v1307, %v1307
    %v1510 = vpack.c.bf16 %v1314, %v1314
    %v1511 = vpack.c.bf16 %v1321, %v1321
    %v1512 = vpack.c.bf16 %v1328, %v1328
    %v1513 = vpack.c.bf16 %v1335, %v1335
    %v1514 = vpack.c.bf16 %v1342, %v1342
    %v1515 = vpack.c.bf16 %v1349, %v1349
    %v1516 = vpack.c.bf16 %v1356, %v1356
    %v1517 = vpack.c.bf16 %v1363, %v1363
    %v1518 = vpack.c.bf16 %v1370, %v1370
    %v1519 = vpack.c.bf16 %v1377, %v1377
    %v1520 = vpack.c.bf16 %v1384, %v1384
    %v1521 = vpack.c.bf16 %v1391, %v1391
    %v1522 = vpack.c.bf16 %v1398, %v1398
    %v1523 = vpack.c.bf16 %v1405, %v1405
    %v1524 = vpack.c.bf16 %v1412, %v1412
    %v1525 = vpack.c.bf16 %v1419, %v1419
    %v1526 = vpack.c.bf16 %v1426, %v1426
    %v1527 = vpack.c.bf16 %v1433, %v1433
    %v1528 = vpack.c.bf16 %v1440, %v1440
    %v1529 = vpack.c.bf16 %v1447, %v1447
    %v1530 = vpack.c.bf16 %v1454, %v1454
    %v1531 = vpack.c.bf16 %v1461, %v1461
    %v1532 = vpack.c.bf16 %v1468, %v1468
    %v1589 = vunpack.c.l.b16 %v1469
    %v1590 = vunpack.c.l.b16 %v1470
    %v1591 = vunpack.c.l.b16 %v1471
    %v1592 = vunpack.c.l.b16 %v1472
    %v1593 = vunpack.c.l.b16 %v1473
    %v1594 = vunpack.c.l.b16 %v1474
    %v1595 = vunpack.c.l.b16 %v1475
    %v1596 = vunpack.c.l.b16 %v1477
    %v1597 = vunpack.c.l.b16 %v1478
    %v1598 = vunpack.c.l.b16 %v1479
    %v1599 = vunpack.c.l.b16 %v1480
    %v1600 = vunpack.c.l.b16 %v1481
    %v1601 = vunpack.c.l.b16 %v1482
    %v1602 = vunpack.c.l.b16 %v1483
    %v1603 = vunpack.c.l.b16 %v1485
    %v1604 = vunpack.c.l.b16 %v1486
    %v1605 = vunpack.c.l.b16 %v1487
    %v1606 = vunpack.c.l.b16 %v1488
    %v1607 = vunpack.c.l.b16 %v1489
    %v1608 = vunpack.c.l.b16 %v1490
    %v1609 = vunpack.c.l.b16 %v1491
    %v1610 = vunpack.c.l.b16 %v1493
    %v1611 = vunpack.c.l.b16 %v1494
    %v1612 = vunpack.c.l.b16 %v1495
    %v1613 = vunpack.c.l.b16 %v1496
    %v1614 = vunpack.c.l.b16 %v1497
    %v1615 = vunpack.c.l.b16 %v1498
    %v1616 = vunpack.c.l.b16 %v1499
    %v1617 = vunpack.c.l.b16 %v1501
    %v1618 = vunpack.c.l.b16 %v1502
    %v1619 = vunpack.c.l.b16 %v1503
    %v1620 = vunpack.c.l.b16 %v1504
    %v1621 = vunpack.c.l.b16 %v1505
    %v1622 = vunpack.c.l.b16 %v1506
    %v1623 = vunpack.c.l.b16 %v1507
    %v1624 = vunpack.c.l.b16 %v1509
    %v1625 = vunpack.c.l.b16 %v1510
    %v1626 = vunpack.c.l.b16 %v1511
    %v1627 = vunpack.c.l.b16 %v1512
    %v1628 = vunpack.c.l.b16 %v1513
    %v1629 = vunpack.c.l.b16 %v1514
    %v1630 = vunpack.c.l.b16 %v1515
    %v1631 = vunpack.c.l.b16 %v1517
    %v1632 = vunpack.c.l.b16 %v1518
    %v1633 = vunpack.c.l.b16 %v1519
    %v1634 = vunpack.c.l.b16 %v1520
    %v1635 = vunpack.c.l.b16 %v1521
    %v1636 = vunpack.c.l.b16 %v1522
    %v1637 = vunpack.c.l.b16 %v1523
    %v1638 = vunpack.c.l.b16 %v1525
    %v1639 = vunpack.c.l.b16 %v1526
    %v1640 = vunpack.c.l.b16 %v1527
    %v1641 = vunpack.c.l.b16 %v1528
    %v1642 = vunpack.c.l.b16 %v1529
    %v1643 = vunpack.c.l.b16 %v1530
    %v1644 = vunpack.c.l.b16 %v1531
    %vm1645 = vcmask 1042434
    %v1646 = vsel %vm1645, %v1590, %v1589
    %vm1647 = vcmask 1043459
    %v1648 = vsel %vm1647, %v1591, %v1646
    %vm1649 = vcmask 1044484
    %v1650 = vsel %vm1649, %v1592, %v1648
    %vm1651 = vcmask 1045509
    %v1652 = vsel %vm1651, %v1593, %v1650
    %vm1653 = vcmask 1046534
    %v1654 = vsel %vm1653, %v1594, %v1652
    %vm1655 = vcmask 1047559
    %v1656 = vsel %vm1655, %v1595, %v1654
    %v1657 = vsel %vm1645, %v1597, %v1596
    %v1658 = vsel %vm1647, %v1598, %v1657
    %v1659 = vsel %vm1649, %v1599, %v1658
    %v1660 = vsel %vm1651, %v1600, %v1659
    %v1661 = vsel %vm1653, %v1601, %v1660
    %v1662 = vsel %vm1655, %v1602, %v1661
    %v1663 = vsel %vm1645, %v1604, %v1603
    %v1664 = vsel %vm1647, %v1605, %v1663
    %v1665 = vsel %vm1649, %v1606, %v1664
    %v1666 = vsel %vm1651, %v1607, %v1665
    %v1667 = vsel %vm1653, %v1608, %v1666
    %v1668 = vsel %vm1655, %v1609, %v1667
    %v1669 = vsel %vm1645, %v1611, %v1610
    %v1670 = vsel %vm1647, %v1612, %v1669
    %v1671 = vsel %vm1649, %v1613, %v1670
    %v1672 = vsel %vm1651, %v1614, %v1671
    %v1673 = vsel %vm1653, %v1615, %v1672
    %v1674 = vsel %vm1655, %v1616, %v1673
    %v1675 = vsel %vm1645, %v1618, %v1617
    %v1676 = vsel %vm1647, %v1619, %v1675
    %v1677 = vsel %vm1649, %v1620, %v1676
    %v1678 = vsel %vm1651, %v1621, %v1677
    %v1679 = vsel %vm1653, %v1622, %v1678
    %v1680 = vsel %vm1655, %v1623, %v1679
    %v1681 = vsel %vm1645, %v1625, %v1624
    %v1682 = vsel %vm1647, %v1626, %v1681
    %v1683 = vsel %vm1649, %v1627, %v1682
    %v1684 = vsel %vm1651, %v1628, %v1683
    %v1685 = vsel %vm1653, %v1629, %v1684
    %v1686 = vsel %vm1655, %v1630, %v1685
    %v1687 = vsel %vm1645, %v1632, %v1631
    %v1688 = vsel %vm1647, %v1633, %v1687
    %v1689 = vsel %vm1649, %v1634, %v1688
    %v1690 = vsel %vm1651, %v1635, %v1689
    %v1691 = vsel %vm1653, %v1636, %v1690
    %v1692 = vsel %vm1655, %v1637, %v1691
    %v1693 = vsel %vm1645, %v1639, %v1638
    %v1694 = vsel %vm1647, %v1640, %v1693
    %v1695 = vsel %vm1649, %v1641, %v1694
    %v1696 = vsel %vm1651, %v1642, %v1695
    %v1697 = vsel %vm1653, %v1643, %v1696
    %v1698 = vsel %vm1655, %v1644, %v1697
    %v1699 = vpack.c.b16 %v1656, %v1656
    %v1700 = vpack.c.b16 %v1662, %v1662
    %v1701 = vpack.c.b16 %v1668, %v1668
    %v1702 = vpack.c.b16 %v1674, %v1674
    %v1703 = vpack.c.b16 %v1680, %v1680
    %v1704 = vpack.c.b16 %v1686, %v1686
    %v1705 = vpack.c.b16 %v1692, %v1692
    %v1706 = vpack.c.b16 %v1698, %v1698
    %vm1715 = vcmask 1040384
    %vm1716 = vsmask.f32 256
    %vm1717 = vmand %vm1715, %vm1716
    %v1718 = vsel %vm1717, 0, %v1699
    %v1719 = vsel %vm1717, 0, %v1700
    %v1720 = vsel %vm1717, 0, %v1701
    %v1721 = vsel %vm1717, 0, %v1702
    %v1722 = vsel %vm1717, 0, %v1703
    %v1723 = vsel %vm1717, 0, %v1704
    %v1724 = vsel %vm1717, 0, %v1705
    %v1725 = vsel %vm1717, 0, %v1706
    %v1734 = vunpack.c.l.b16 %v1476
    %v1735 = vunpack.c.l.b16 %v1484
    %v1736 = vunpack.c.l.b16 %v1492
    %v1737 = vunpack.c.l.b16 %v1500
    %v1738 = vunpack.c.l.b16 %v1508
    %v1739 = vunpack.c.l.b16 %v1516
    %v1740 = vunpack.c.l.b16 %v1524
    %v1741 = vunpack.c.l.b16 %v1532
    %vm1742 = vcmask 1041409
    %v1743 = vsel %vm1742, %v1591, %v1590
    %v1744 = vsel %vm1645, %v1592, %v1743
    %v1745 = vsel %vm1647, %v1593, %v1744
    %v1746 = vsel %vm1649, %v1594, %v1745
    %v1747 = vsel %vm1651, %v1595, %v1746
    %v1748 = vsel %vm1653, %v1734, %v1747
    %v1749 = vsel %vm1742, %v1598, %v1597
    %v1750 = vsel %vm1645, %v1599, %v1749
    %v1751 = vsel %vm1647, %v1600, %v1750
    %v1752 = vsel %vm1649, %v1601, %v1751
    %v1753 = vsel %vm1651, %v1602, %v1752
    %v1754 = vsel %vm1653, %v1735, %v1753
    %v1755 = vsel %vm1742, %v1605, %v1604
    %v1756 = vsel %vm1645, %v1606, %v1755
    %v1757 = vsel %vm1647, %v1607, %v1756
    %v1758 = vsel %vm1649, %v1608, %v1757
    %v1759 = vsel %vm1651, %v1609, %v1758
    %v1760 = vsel %vm1653, %v1736, %v1759
    %v1761 = vsel %vm1742, %v1612, %v1611
    %v1762 = vsel %vm1645, %v1613, %v1761
    %v1763 = vsel %vm1647, %v1614, %v1762
    %v1764 = vsel %vm1649, %v1615, %v1763
    %v1765 = vsel %vm1651, %v1616, %v1764
    %v1766 = vsel %vm1653, %v1737, %v1765
    %v1767 = vsel %vm1742, %v1619, %v1618
    %v1768 = vsel %vm1645, %v1620, %v1767
    %v1769 = vsel %vm1647, %v1621, %v1768
    %v1770 = vsel %vm1649, %v1622, %v1769
    %v1771 = vsel %vm1651, %v1623, %v1770
    %v1772 = vsel %vm1653, %v1738, %v1771
    %v1773 = vsel %vm1742, %v1626, %v1625
    %v1774 = vsel %vm1645, %v1627, %v1773
    %v1775 = vsel %vm1647, %v1628, %v1774
    %v1776 = vsel %vm1649, %v1629, %v1775
    %v1777 = vsel %vm1651, %v1630, %v1776
    %v1778 = vsel %vm1653, %v1739, %v1777
    %v1779 = vsel %vm1742, %v1633, %v1632
    %v1780 = vsel %vm1645, %v1634, %v1779
    %v1781 = vsel %vm1647, %v1635, %v1780
    %v1782 = vsel %vm1649, %v1636, %v1781
    %v1783 = vsel %vm1651, %v1637, %v1782
    %v1784 = vsel %vm1653, %v1740, %v1783
    %v1785 = vsel %vm1742, %v1640, %v1639
    %v1786 = vsel %vm1645, %v1641, %v1785
    %v1787 = vsel %vm1647, %v1642, %v1786
    %v1788 = vsel %vm1649, %v1643, %v1787
    %v1789 = vsel %vm1651, %v1644, %v1788
    %v1790 = vsel %vm1653, %v1741, %v1789
    %v1791 = vpack.c.b16 %v1748, %v1748
    %v1792 = vpack.c.b16 %v1754, %v1754
    %v1793 = vpack.c.b16 %v1760, %v1760
    %v1794 = vpack.c.b16 %v1766, %v1766
    %v1795 = vpack.c.b16 %v1772, %v1772
    %v1796 = vpack.c.b16 %v1778, %v1778
    %v1797 = vpack.c.b16 %v1784, %v1784
    %v1798 = vpack.c.b16 %v1790, %v1790
    %vm1807 = vcmask 1043456
    %vm1808 = vsmask.f32 3328
    %vm1809 = vmand %vm1807, %vm1808
    %v1810 = vsel %vm1809, %v1791, 0
    %v1811 = vsel %vm1809, %v1792, 0
    %v1812 = vsel %vm1809, %v1793, 0
    %v1813 = vsel %vm1809, %v1794, 0
    %v1814 = vsel %vm1809, %v1795, 0
    %v1815 = vsel %vm1809, %v1796, 0
    %v1816 = vsel %vm1809, %v1797, 0
    %v1817 = vsel %vm1809, %v1798, 0
    %v1818 = vld [vmem:[%s3] sm:$0xf]
    %v1819 = vld [vmem:[%s3 + $0x4] sm:$0xf]
    %v1820 = vld [vmem:[%s3 + $0x8] sm:$0xf]
    %v1821 = vld [vmem:[%s3 + $0xc] sm:$0xf]
    %v1822 = vld [vmem:[%s3 + $0x10] sm:$0xf]
    %v1823 = vld [vmem:[%s3 + $0x14] sm:$0xf]
    %v1824 = vld [vmem:[%s3 + $0x18] sm:$0xf]
    %v1825 = vld [vmem:[%s3 + $0x1c] sm:$0xf]
    %s1826 = scalar_lea.vmem %s3, 32
    %v1827 = vld [vmem:[%s1826] sm:$0xf]
    %v1828 = vld [vmem:[%s1826 + $0x4] sm:$0xf]
    %v1829 = vld [vmem:[%s1826 + $0x8] sm:$0xf]
    %v1830 = vld [vmem:[%s1826 + $0xc] sm:$0xf]
    %v1831 = vld [vmem:[%s1826 + $0x10] sm:$0xf]
    %v1832 = vld [vmem:[%s1826 + $0x14] sm:$0xf]
    %v1833 = vld [vmem:[%s1826 + $0x18] sm:$0xf]
    %v1834 = vld [vmem:[%s1826 + $0x1c] sm:$0xf]
    %v1835 = vsel %vm1742, %v1590, %v1589
    %v1836 = vsel %vm1645, %v1591, %v1835
    %v1837 = vsel %vm1647, %v1592, %v1836
    %v1838 = vsel %vm1649, %v1593, %v1837
    %v1839 = vsel %vm1651, %v1594, %v1838
    %v1840 = vsel %vm1653, %v1595, %v1839
    %v1841 = vsel %vm1655, %v1734, %v1840
    %v1842 = vsel %vm1742, %v1597, %v1596
    %v1843 = vsel %vm1645, %v1598, %v1842
    %v1844 = vsel %vm1647, %v1599, %v1843
    %v1845 = vsel %vm1649, %v1600, %v1844
    %v1846 = vsel %vm1651, %v1601, %v1845
    %v1847 = vsel %vm1653, %v1602, %v1846
    %v1848 = vsel %vm1655, %v1735, %v1847
    %v1849 = vsel %vm1742, %v1604, %v1603
    %v1850 = vsel %vm1645, %v1605, %v1849
    %v1851 = vsel %vm1647, %v1606, %v1850
    %v1852 = vsel %vm1649, %v1607, %v1851
    %v1853 = vsel %vm1651, %v1608, %v1852
    %v1854 = vsel %vm1653, %v1609, %v1853
    %v1855 = vsel %vm1655, %v1736, %v1854
    %v1856 = vsel %vm1742, %v1611, %v1610
    %v1857 = vsel %vm1645, %v1612, %v1856
    %v1858 = vsel %vm1647, %v1613, %v1857
    %v1859 = vsel %vm1649, %v1614, %v1858
    %v1860 = vsel %vm1651, %v1615, %v1859
    %v1861 = vsel %vm1653, %v1616, %v1860
    %v1862 = vsel %vm1655, %v1737, %v1861
    %v1863 = vsel %vm1742, %v1618, %v1617
    %v1864 = vsel %vm1645, %v1619, %v1863
    %v1865 = vsel %vm1647, %v1620, %v1864
    %v1866 = vsel %vm1649, %v1621, %v1865
    %v1867 = vsel %vm1651, %v1622, %v1866
    %v1868 = vsel %vm1653, %v1623, %v1867
    %v1869 = vsel %vm1655, %v1738, %v1868
    %v1870 = vsel %vm1742, %v1625, %v1624
    %v1871 = vsel %vm1645, %v1626, %v1870
    %v1872 = vsel %vm1647, %v1627, %v1871
    %v1873 = vsel %vm1649, %v1628, %v1872
    %v1874 = vsel %vm1651, %v1629, %v1873
    %v1875 = vsel %vm1653, %v1630, %v1874
    %v1876 = vsel %vm1655, %v1739, %v1875
    %v1877 = vsel %vm1742, %v1632, %v1631
    %v1878 = vsel %vm1645, %v1633, %v1877
    %v1879 = vsel %vm1647, %v1634, %v1878
    %v1880 = vsel %vm1649, %v1635, %v1879
    %v1881 = vsel %vm1651, %v1636, %v1880
    %v1882 = vsel %vm1653, %v1637, %v1881
    %v1883 = vsel %vm1655, %v1740, %v1882
    %v1884 = vsel %vm1742, %v1639, %v1638
    %v1885 = vsel %vm1645, %v1640, %v1884
    %v1886 = vsel %vm1647, %v1641, %v1885
    %v1887 = vsel %vm1649, %v1642, %v1886
    %v1888 = vsel %vm1651, %v1643, %v1887
    %v1889 = vsel %vm1653, %v1644, %v1888
    %v1890 = vsel %vm1655, %v1741, %v1889
    %v1891 = vpack.c.b16 %v1848, %v1841
    %v1892 = vpack.c.b16 %v1862, %v1855
    %v1893 = vpack.c.b16 %v1876, %v1869
    %v1894 = vpack.c.b16 %v1890, %v1883
    %v1903 = vunpack.c.l.b16 %v1827
    %v1904 = vunpack.c.l.b16 %v1828
    %v1905 = vunpack.c.l.b16 %v1829
    %v1906 = vunpack.c.l.b16 %v1830
    %v1907 = vunpack.c.l.b16 %v1831
    %v1908 = vunpack.c.l.b16 %v1832
    %v1909 = vunpack.c.l.b16 %v1833
    %v1910 = vunpack.c.l.b16 %v1834
    %v1911 = vpack.c.b16 %v1904, %v1903
    %v1912 = vpack.c.b16 %v1906, %v1905
    %v1913 = vpack.c.b16 %v1908, %v1907
    %v1914 = vpack.c.b16 %v1910, %v1909
    %vm1919 = vcmask 523264
    %v1921 = vsel %vm1919, %v1891, 0
    %v1924 = vsel %vm1919, %v1892, 0
    %v1927 = vsel %vm1919, %v1893, 0
    %v1930 = vsel %vm1919, %v1894, 0
    %1932 = vmatprep.subr.bf16.mxu0 0
    %1933 = vmatpush1.bf16.msra.mxu0 0
    %1934 = vmatprep.subr.bf16.mxu0 0
    %1935 = vmatpush1.bf16.msra.mxu0 0
    %1936 = vmatprep.subr.bf16.mxu0 0
    %1937 = vmatpush1.bf16.msra.mxu0 0
    %1938 = vmatprep.subr.bf16.mxu0 0
    %1939 = vmatpush1.bf16.msra.mxu0 0
    %1940 = vmatprep.subr.bf16.mxu0 0
    %1941 = vmatpush1.bf16.msra.mxu0 %v1914
    %1942 = vmatprep.subr.bf16.mxu0 0
    %1943 = vmatpush1.bf16.msra.mxu0 %v1913
    %1944 = vmatprep.subr.bf16.mxu0 0
    %1945 = vmatpush1.bf16.msra.mxu0 %v1912
    %1946 = vmatprep.subr.bf16.mxu0 0
    %1947 = vmatpush1.bf16.msra.mxu0 %v1911
    %1948 = vmatprep.subr.bf16.mxu0 0
    %1949 = vmatpush2.bf16.msra.mxu0 0
    %1950 = vmatprep.subr.bf16.mxu0 0
    %1951 = vmatpush2.bf16.msra.mxu0 0
    %1952 = vmatprep.subr.bf16.mxu0 0
    %1953 = vmatpush2.bf16.msra.mxu0 0
    %1954 = vmatprep.subr.bf16.mxu0 0
    %1955 = vmatpush2.bf16.msra.mxu0 0
    %1956 = vmatprep.subr.bf16.mxu0 0
    %1957 = vmatpush2.bf16.msra.mxu0 0
    %1958 = vmatprep.subr.bf16.mxu0 0
    %1959 = vmatpush2.bf16.msra.mxu0 0
    %1960 = vmatprep.subr.bf16.mxu0 0
    %1961 = vmatpush2.bf16.msra.mxu0 0
    %1962 = vmatprep.subr.bf16.mxu0 0
    %1963 = vmatpush2.bf16.msra.mxu0 0
    %1964 = vmatprep.mubr.bf16.mxu0 0
    %1965 = vmatmul.mubr.bf16.gmra.mxu0 %v1921
    %v1966 = vpop.f32.mrf.mxu0
    %v1967 = vadd.f32 0.0, %v1966
    %v1968 = vpop.f32.mrf.mxu0
    %v1969 = vpop.f32.mrf.mxu0
    %v1970 = vadd.f32 0.0, %v1969
    %v1971 = vpop.f32.mrf.mxu0
    %1972 = vmatprep.mubr.bf16.mxu0 0
    %1973 = vmatmul.mubr.bf16.gmra.mxu0 %v1924
    %v1974 = vpop.f32.mrf.mxu0
    %v1975 = vadd.f32 0.0, %v1974
    %v1976 = vpop.f32.mrf.mxu0
    %v1977 = vpop.f32.mrf.mxu0
    %v1978 = vadd.f32 0.0, %v1977
    %v1979 = vpop.f32.mrf.mxu0
    %1980 = vmatprep.mubr.bf16.mxu0 0
    %1981 = vmatmul.mubr.bf16.gmra.mxu0 %v1927
    %v1982 = vpop.f32.mrf.mxu0
    %v1983 = vadd.f32 0.0, %v1982
    %v1984 = vpop.f32.mrf.mxu0
    %v1985 = vpop.f32.mrf.mxu0
    %v1986 = vadd.f32 0.0, %v1985
    %v1987 = vpop.f32.mrf.mxu0
    %1988 = vmatprep.mubr.bf16.mxu0 0
    %1989 = vmatmul.mubr.bf16.gmra.mxu0 %v1930
    %v1990 = vpop.f32.mrf.mxu0
    %v1991 = vadd.f32 0.0, %v1990
    %v1992 = vpop.f32.mrf.mxu0
    %v1993 = vpop.f32.mrf.mxu0
    %v1994 = vadd.f32 0.0, %v1993
    %v1995 = vpop.f32.mrf.mxu0
    %1996 = vdwg.mxu0
    %v2005 = vunpack.c.l.b16 %v1718
    %v2006 = vunpack.c.l.b16 %v1719
    %v2007 = vunpack.c.l.b16 %v1720
    %v2008 = vunpack.c.l.b16 %v1721
    %v2009 = vunpack.c.l.b16 %v1722
    %v2010 = vunpack.c.l.b16 %v1723
    %v2011 = vunpack.c.l.b16 %v1724
    %v2012 = vunpack.c.l.b16 %v1725
    %v2013 = vpack.c.b16 %v2006, %v2005
    %v2014 = vpack.c.b16 %v2008, %v2007
    %v2015 = vpack.c.b16 %v2010, %v2009
    %v2016 = vpack.c.b16 %v2012, %v2011
    %v2025 = vunpack.c.l.b16 %v1818
    %v2026 = vunpack.c.l.b16 %v1819
    %v2027 = vunpack.c.l.b16 %v1820
    %v2028 = vunpack.c.l.b16 %v1821
    %v2029 = vunpack.c.l.b16 %v1822
    %v2030 = vunpack.c.l.b16 %v1823
    %v2031 = vunpack.c.l.b16 %v1824
    %v2032 = vunpack.c.l.b16 %v1825
    %v2033 = vpack.c.b16 %v2026, %v2025
    %v2034 = vpack.c.b16 %v2028, %v2027
    %v2035 = vpack.c.b16 %v2030, %v2029
    %v2036 = vpack.c.b16 %v2032, %v2031
    %v2042 = vsel %vm1919, %v2013, 0
    %v2045 = vsel %vm1919, %v2014, 0
    %v2048 = vsel %vm1919, %v2015, 0
    %v2051 = vsel %vm1919, %v2016, 0
    %2053 = vmatprep.subr.bf16.mxu0 0
    %2054 = vmatpush1.bf16.msra.mxu0 0
    %2055 = vmatprep.subr.bf16.mxu0 0
    %2056 = vmatpush1.bf16.msra.mxu0 0
    %2057 = vmatprep.subr.bf16.mxu0 0
    %2058 = vmatpush1.bf16.msra.mxu0 0
    %2059 = vmatprep.subr.bf16.mxu0 0
    %2060 = vmatpush1.bf16.msra.mxu0 0
    %2061 = vmatprep.subr.bf16.mxu0 0
    %2062 = vmatpush1.bf16.msra.mxu0 %v2036
    %2063 = vmatprep.subr.bf16.mxu0 0
    %2064 = vmatpush1.bf16.msra.mxu0 %v2035
    %2065 = vmatprep.subr.bf16.mxu0 0
    %2066 = vmatpush1.bf16.msra.mxu0 %v2034
    %2067 = vmatprep.subr.bf16.mxu0 0
    %2068 = vmatpush1.bf16.msra.mxu0 %v2033
    %2069 = vmatprep.subr.bf16.mxu0 0
    %2070 = vmatpush2.bf16.msra.mxu0 0
    %2071 = vmatprep.subr.bf16.mxu0 0
    %2072 = vmatpush2.bf16.msra.mxu0 0
    %2073 = vmatprep.subr.bf16.mxu0 0
    %2074 = vmatpush2.bf16.msra.mxu0 0
    %2075 = vmatprep.subr.bf16.mxu0 0
    %2076 = vmatpush2.bf16.msra.mxu0 0
    %2077 = vmatprep.subr.bf16.mxu0 0
    %2078 = vmatpush2.bf16.msra.mxu0 0
    %2079 = vmatprep.subr.bf16.mxu0 0
    %2080 = vmatpush2.bf16.msra.mxu0 0
    %2081 = vmatprep.subr.bf16.mxu0 0
    %2082 = vmatpush2.bf16.msra.mxu0 0
    %2083 = vmatprep.subr.bf16.mxu0 0
    %2084 = vmatpush2.bf16.msra.mxu0 0
    %2085 = vmatprep.mubr.bf16.mxu0 0
    %2086 = vmatmul.mubr.bf16.gmra.mxu0 %v2042
    %v2087 = vpop.f32.mrf.mxu0
    %v2088 = vadd.f32 %v1967, %v2087
    %v2089 = vpop.f32.mrf.mxu0
    %v2090 = vpop.f32.mrf.mxu0
    %v2091 = vadd.f32 %v1970, %v2090
    %v2092 = vpop.f32.mrf.mxu0
    %2093 = vmatprep.mubr.bf16.mxu0 0
    %2094 = vmatmul.mubr.bf16.gmra.mxu0 %v2045
    %v2095 = vpop.f32.mrf.mxu0
    %v2096 = vadd.f32 %v1975, %v2095
    %v2097 = vpop.f32.mrf.mxu0
    %v2098 = vpop.f32.mrf.mxu0
    %v2099 = vadd.f32 %v1978, %v2098
    %v2100 = vpop.f32.mrf.mxu0
    %2101 = vmatprep.mubr.bf16.mxu0 0
    %2102 = vmatmul.mubr.bf16.gmra.mxu0 %v2048
    %v2103 = vpop.f32.mrf.mxu0
    %v2104 = vadd.f32 %v1983, %v2103
    %v2105 = vpop.f32.mrf.mxu0
    %v2106 = vpop.f32.mrf.mxu0
    %v2107 = vadd.f32 %v1986, %v2106
    %v2108 = vpop.f32.mrf.mxu0
    %2109 = vmatprep.mubr.bf16.mxu0 0
    %2110 = vmatmul.mubr.bf16.gmra.mxu0 %v2051
    %v2111 = vpop.f32.mrf.mxu0
    %v2112 = vadd.f32 %v1991, %v2111
    %v2113 = vpop.f32.mrf.mxu0
    %v2114 = vpop.f32.mrf.mxu0
    %v2115 = vadd.f32 %v1994, %v2114
    %v2116 = vpop.f32.mrf.mxu0
    %2117 = vdwg.mxu0
    %s2118 = scalar_lea.vmem %s3, 64
    %v2119 = vld [vmem:[%s2118] sm:$0xf]
    %v2120 = vld [vmem:[%s2118 + $0x4] sm:$0xf]
    %v2121 = vld [vmem:[%s2118 + $0x8] sm:$0xf]
    %v2122 = vld [vmem:[%s2118 + $0xc] sm:$0xf]
    %v2123 = vld [vmem:[%s2118 + $0x10] sm:$0xf]
    %v2124 = vld [vmem:[%s2118 + $0x14] sm:$0xf]
    %v2125 = vld [vmem:[%s2118 + $0x18] sm:$0xf]
    %v2126 = vld [vmem:[%s2118 + $0x1c] sm:$0xf]
    %v2135 = vunpack.c.l.b16 %v1810
    %v2136 = vunpack.c.l.b16 %v1811
    %v2137 = vunpack.c.l.b16 %v1812
    %v2138 = vunpack.c.l.b16 %v1813
    %v2139 = vunpack.c.l.b16 %v1814
    %v2140 = vunpack.c.l.b16 %v1815
    %v2141 = vunpack.c.l.b16 %v1816
    %v2142 = vunpack.c.l.b16 %v1817
    %v2143 = vpack.c.b16 %v2136, %v2135
    %v2144 = vpack.c.b16 %v2138, %v2137
    %v2145 = vpack.c.b16 %v2140, %v2139
    %v2146 = vpack.c.b16 %v2142, %v2141
    %v2155 = vunpack.c.l.b16 %v2119
    %v2156 = vunpack.c.l.b16 %v2120
    %v2157 = vunpack.c.l.b16 %v2121
    %v2158 = vunpack.c.l.b16 %v2122
    %v2159 = vunpack.c.l.b16 %v2123
    %v2160 = vunpack.c.l.b16 %v2124
    %v2161 = vunpack.c.l.b16 %v2125
    %v2162 = vunpack.c.l.b16 %v2126
    %v2163 = vpack.c.b16 %v2156, %v2155
    %v2164 = vpack.c.b16 %v2158, %v2157
    %v2165 = vpack.c.b16 %v2160, %v2159
    %v2166 = vpack.c.b16 %v2162, %v2161
    %v2172 = vsel %vm1919, %v2143, 0
    %v2175 = vsel %vm1919, %v2144, 0
    %v2178 = vsel %vm1919, %v2145, 0
    %v2181 = vsel %vm1919, %v2146, 0
    %2183 = vmatprep.subr.bf16.mxu0 0
    %2184 = vmatpush1.bf16.msra.mxu0 0
    %2185 = vmatprep.subr.bf16.mxu0 0
    %2186 = vmatpush1.bf16.msra.mxu0 0
    %2187 = vmatprep.subr.bf16.mxu0 0
    %2188 = vmatpush1.bf16.msra.mxu0 0
    %2189 = vmatprep.subr.bf16.mxu0 0
    %2190 = vmatpush1.bf16.msra.mxu0 0
    %2191 = vmatprep.subr.bf16.mxu0 0
    %2192 = vmatpush1.bf16.msra.mxu0 %v2166
    %2193 = vmatprep.subr.bf16.mxu0 0
    %2194 = vmatpush1.bf16.msra.mxu0 %v2165
    %2195 = vmatprep.subr.bf16.mxu0 0
    %2196 = vmatpush1.bf16.msra.mxu0 %v2164
    %2197 = vmatprep.subr.bf16.mxu0 0
    %2198 = vmatpush1.bf16.msra.mxu0 %v2163
    %2199 = vmatprep.subr.bf16.mxu0 0
    %2200 = vmatpush2.bf16.msra.mxu0 0
    %2201 = vmatprep.subr.bf16.mxu0 0
    %2202 = vmatpush2.bf16.msra.mxu0 0
    %2203 = vmatprep.subr.bf16.mxu0 0
    %2204 = vmatpush2.bf16.msra.mxu0 0
    %2205 = vmatprep.subr.bf16.mxu0 0
    %2206 = vmatpush2.bf16.msra.mxu0 0
    %2207 = vmatprep.subr.bf16.mxu0 0
    %2208 = vmatpush2.bf16.msra.mxu0 0
    %2209 = vmatprep.subr.bf16.mxu0 0
    %2210 = vmatpush2.bf16.msra.mxu0 0
    %2211 = vmatprep.subr.bf16.mxu0 0
    %2212 = vmatpush2.bf16.msra.mxu0 0
    %2213 = vmatprep.subr.bf16.mxu0 0
    %2214 = vmatpush2.bf16.msra.mxu0 0
    %2215 = vmatprep.mubr.bf16.mxu0 0
    %2216 = vmatmul.mubr.bf16.gmra.mxu0 %v2172
    %v2217 = vpop.f32.mrf.mxu0
    %v2218 = vadd.f32 0.0, %v2217
    %v2219 = vpop.f32.mrf.mxu0
    %v2220 = vpop.f32.mrf.mxu0
    %v2221 = vadd.f32 0.0, %v2220
    %v2222 = vpop.f32.mrf.mxu0
    %2223 = vmatprep.mubr.bf16.mxu0 0
    %2224 = vmatmul.mubr.bf16.gmra.mxu0 %v2175
    %v2225 = vpop.f32.mrf.mxu0
    %v2226 = vadd.f32 0.0, %v2225
    %v2227 = vpop.f32.mrf.mxu0
    %v2228 = vpop.f32.mrf.mxu0
    %v2229 = vadd.f32 0.0, %v2228
    %v2230 = vpop.f32.mrf.mxu0
    %2231 = vmatprep.mubr.bf16.mxu0 0
    %2232 = vmatmul.mubr.bf16.gmra.mxu0 %v2178
    %v2233 = vpop.f32.mrf.mxu0
    %v2234 = vadd.f32 0.0, %v2233
    %v2235 = vpop.f32.mrf.mxu0
    %v2236 = vpop.f32.mrf.mxu0
    %v2237 = vadd.f32 0.0, %v2236
    %v2238 = vpop.f32.mrf.mxu0
    %2239 = vmatprep.mubr.bf16.mxu0 0
    %2240 = vmatmul.mubr.bf16.gmra.mxu0 %v2181
    %v2241 = vpop.f32.mrf.mxu0
    %v2242 = vadd.f32 0.0, %v2241
    %v2243 = vpop.f32.mrf.mxu0
    %v2244 = vpop.f32.mrf.mxu0
    %v2245 = vadd.f32 0.0, %v2244
    %v2246 = vpop.f32.mrf.mxu0
    %2247 = vdwg.mxu0
    %v2248 = vadd.f32 %v2088, %v2218
    %v2249 = vadd.f32 %v2091, %v2221
    %v2250 = vadd.f32 %v2096, %v2226
    %v2251 = vadd.f32 %v2099, %v2229
    %v2252 = vadd.f32 %v2104, %v2234
    %v2253 = vadd.f32 %v2107, %v2237
    %v2254 = vadd.f32 %v2112, %v2242
    %v2255 = vadd.f32 %v2115, %v2245
    %v2256 = vld [vmem:[%s4] sm:$0x1]
    %v2258 = vlaneseq
    %v2259 = vshrl.u32 %v2258, 7
    %v2260 = vsub.s32 0, %v2259
    %v2261 = vrot.slane %v2256, %v2260
    %v2263 = vadd.f32 %v2248, %v2261
    %v2264 = vadd.f32 %v2249, %v2261
    %v2265 = vadd.f32 %v2250, %v2261
    %v2266 = vadd.f32 %v2251, %v2261
    %v2267 = vadd.f32 %v2252, %v2261
    %v2268 = vadd.f32 %v2253, %v2261
    %v2269 = vadd.f32 %v2254, %v2261
    %v2270 = vadd.f32 %v2255, %v2261
    %v2271 = vmax.f32 %v2263, 0.0
    %v2272 = vmax.f32 %v2264, 0.0
    %v2273 = vmax.f32 %v2265, 0.0
    %v2274 = vmax.f32 %v2266, 0.0
    %v2275 = vmax.f32 %v2267, 0.0
    %v2276 = vmax.f32 %v2268, 0.0
    %v2277 = vmax.f32 %v2269, 0.0
    %v2278 = vmax.f32 %v2270, 0.0
    %v2287 = vcombine.high %v2271, %v2271
    %v2289 = vunpack.c.l.s4 1983009808
    %v2290 = vunpack.c.0.s8 %v2289
    %v2291 = vlaneseq
    %v2292 = vshrl.u32 %v2291, 7
    %v2293 = vsub.s32 %v2290, %v2292
    %v2294 = vrot.slane %v2271, %v2293
    %v2296 = vunpack.c.l.s4 1983009808
    %v2297 = vunpack.c.0.s8 %v2296
    %v2298 = vlaneseq
    %v2299 = vshrl.u32 %v2298, 7
    %v2300 = vsub.s32 %v2297, %v2299
    %v2301 = vrot.slane %v2287, %v2300
    %v2302 = vcombine.high %v2294, %v2294
    %v2303 = vcombine.high %v2301, %v2301
    %v2304 = vcombine.high %v2272, %v2272
    %v2306 = vunpack.c.l.s4 1983009808
    %v2307 = vunpack.c.0.s8 %v2306
    %v2308 = vlaneseq
    %v2309 = vshrl.u32 %v2308, 7
    %v2310 = vsub.s32 %v2307, %v2309
    %v2311 = vrot.slane %v2272, %v2310
    %v2313 = vunpack.c.l.s4 1983009808
    %v2314 = vunpack.c.0.s8 %v2313
    %v2315 = vlaneseq
    %v2316 = vshrl.u32 %v2315, 7
    %v2317 = vsub.s32 %v2314, %v2316
    %v2318 = vrot.slane %v2304, %v2317
    %v2319 = vcombine.high %v2311, %v2311
    %v2320 = vcombine.high %v2318, %v2318
    %v2321 = vcombine.high %v2273, %v2273
    %v2323 = vunpack.c.l.s4 1983009808
    %v2324 = vunpack.c.0.s8 %v2323
    %v2325 = vlaneseq
    %v2326 = vshrl.u32 %v2325, 7
    %v2327 = vsub.s32 %v2324, %v2326
    %v2328 = vrot.slane %v2273, %v2327
    %v2330 = vunpack.c.l.s4 1983009808
    %v2331 = vunpack.c.0.s8 %v2330
    %v2332 = vlaneseq
    %v2333 = vshrl.u32 %v2332, 7
    %v2334 = vsub.s32 %v2331, %v2333
    %v2335 = vrot.slane %v2321, %v2334
    %v2336 = vcombine.high %v2328, %v2328
    %v2337 = vcombine.high %v2335, %v2335
    %v2338 = vcombine.high %v2274, %v2274
    %v2340 = vunpack.c.l.s4 1983009808
    %v2341 = vunpack.c.0.s8 %v2340
    %v2342 = vlaneseq
    %v2343 = vshrl.u32 %v2342, 7
    %v2344 = vsub.s32 %v2341, %v2343
    %v2345 = vrot.slane %v2274, %v2344
    %v2347 = vunpack.c.l.s4 1983009808
    %v2348 = vunpack.c.0.s8 %v2347
    %v2349 = vlaneseq
    %v2350 = vshrl.u32 %v2349, 7
    %v2351 = vsub.s32 %v2348, %v2350
    %v2352 = vrot.slane %v2338, %v2351
    %v2353 = vcombine.high %v2345, %v2345
    %v2354 = vcombine.high %v2352, %v2352
    %v2355 = vcombine.high %v2275, %v2275
    %v2357 = vunpack.c.l.s4 1983009808
    %v2358 = vunpack.c.0.s8 %v2357
    %v2359 = vlaneseq
    %v2360 = vshrl.u32 %v2359, 7
    %v2361 = vsub.s32 %v2358, %v2360
    %v2362 = vrot.slane %v2275, %v2361
    %v2364 = vunpack.c.l.s4 1983009808
    %v2365 = vunpack.c.0.s8 %v2364
    %v2366 = vlaneseq
    %v2367 = vshrl.u32 %v2366, 7
    %v2368 = vsub.s32 %v2365, %v2367
    %v2369 = vrot.slane %v2355, %v2368
    %v2370 = vcombine.high %v2362, %v2362
    %v2371 = vcombine.high %v2369, %v2369
    %v2372 = vcombine.high %v2276, %v2276
    %v2374 = vunpack.c.l.s4 1983009808
    %v2375 = vunpack.c.0.s8 %v2374
    %v2376 = vlaneseq
    %v2377 = vshrl.u32 %v2376, 7
    %v2378 = vsub.s32 %v2375, %v2377
    %v2379 = vrot.slane %v2276, %v2378
    %v2381 = vunpack.c.l.s4 1983009808
    %v2382 = vunpack.c.0.s8 %v2381
    %v2383 = vlaneseq
    %v2384 = vshrl.u32 %v2383, 7
    %v2385 = vsub.s32 %v2382, %v2384
    %v2386 = vrot.slane %v2372, %v2385
    %v2387 = vcombine.high %v2379, %v2379
    %v2388 = vcombine.high %v2386, %v2386
    %v2389 = vcombine.high %v2277, %v2277
    %v2391 = vunpack.c.l.s4 1983009808
    %v2392 = vunpack.c.0.s8 %v2391
    %v2393 = vlaneseq
    %v2394 = vshrl.u32 %v2393, 7
    %v2395 = vsub.s32 %v2392, %v2394
    %v2396 = vrot.slane %v2277, %v2395
    %v2398 = vunpack.c.l.s4 1983009808
    %v2399 = vunpack.c.0.s8 %v2398
    %v2400 = vlaneseq
    %v2401 = vshrl.u32 %v2400, 7
    %v2402 = vsub.s32 %v2399, %v2401
    %v2403 = vrot.slane %v2389, %v2402
    %v2404 = vcombine.high %v2396, %v2396
    %v2405 = vcombine.high %v2403, %v2403
    %v2406 = vcombine.high %v2278, %v2278
    %v2408 = vunpack.c.l.s4 1983009808
    %v2409 = vunpack.c.0.s8 %v2408
    %v2410 = vlaneseq
    %v2411 = vshrl.u32 %v2410, 7
    %v2412 = vsub.s32 %v2409, %v2411
    %v2413 = vrot.slane %v2278, %v2412
    %v2415 = vunpack.c.l.s4 1983009808
    %v2416 = vunpack.c.0.s8 %v2415
    %v2417 = vlaneseq
    %v2418 = vshrl.u32 %v2417, 7
    %v2419 = vsub.s32 %v2416, %v2418
    %v2420 = vrot.slane %v2406, %v2419
    %v2421 = vcombine.high %v2413, %v2413
    %v2422 = vcombine.high %v2420, %v2420
    %v2455 = vsel %vm262, %v2294, -inf
    %v2456 = vrot.slane %v2455, 4
    %v2457 = vmax.f32 %v2455, %v2456
    %v2458 = vrot.slane %v2457, 2
    %v2459 = vmax.f32 %v2457, %v2458
    %v2460 = vrot.slane %v2459, 1
    %v2461 = vmax.f32 %v2459, %v2460
    %v2462 = vsel %vm262, %v2302, -inf
    %v2463 = vrot.slane %v2462, 4
    %v2464 = vmax.f32 %v2462, %v2463
    %v2465 = vrot.slane %v2464, 2
    %v2466 = vmax.f32 %v2464, %v2465
    %v2467 = vrot.slane %v2466, 1
    %v2468 = vmax.f32 %v2466, %v2467
    %v2469 = vsel %vm262, %v2301, -inf
    %v2470 = vrot.slane %v2469, 4
    %v2471 = vmax.f32 %v2469, %v2470
    %v2472 = vrot.slane %v2471, 2
    %v2473 = vmax.f32 %v2471, %v2472
    %v2474 = vrot.slane %v2473, 1
    %v2475 = vmax.f32 %v2473, %v2474
    %v2476 = vsel %vm262, %v2303, -inf
    %v2477 = vrot.slane %v2476, 4
    %v2478 = vmax.f32 %v2476, %v2477
    %v2479 = vrot.slane %v2478, 2
    %v2480 = vmax.f32 %v2478, %v2479
    %v2481 = vrot.slane %v2480, 1
    %v2482 = vmax.f32 %v2480, %v2481
    %v2483 = vsel %vm262, %v2311, -inf
    %v2484 = vrot.slane %v2483, 4
    %v2485 = vmax.f32 %v2483, %v2484
    %v2486 = vrot.slane %v2485, 2
    %v2487 = vmax.f32 %v2485, %v2486
    %v2488 = vrot.slane %v2487, 1
    %v2489 = vmax.f32 %v2487, %v2488
    %v2490 = vsel %vm262, %v2319, -inf
    %v2491 = vrot.slane %v2490, 4
    %v2492 = vmax.f32 %v2490, %v2491
    %v2493 = vrot.slane %v2492, 2
    %v2494 = vmax.f32 %v2492, %v2493
    %v2495 = vrot.slane %v2494, 1
    %v2496 = vmax.f32 %v2494, %v2495
    %v2497 = vsel %vm262, %v2318, -inf
    %v2498 = vrot.slane %v2497, 4
    %v2499 = vmax.f32 %v2497, %v2498
    %v2500 = vrot.slane %v2499, 2
    %v2501 = vmax.f32 %v2499, %v2500
    %v2502 = vrot.slane %v2501, 1
    %v2503 = vmax.f32 %v2501, %v2502
    %v2504 = vsel %vm262, %v2320, -inf
    %v2505 = vrot.slane %v2504, 4
    %v2506 = vmax.f32 %v2504, %v2505
    %v2507 = vrot.slane %v2506, 2
    %v2508 = vmax.f32 %v2506, %v2507
    %v2509 = vrot.slane %v2508, 1
    %v2510 = vmax.f32 %v2508, %v2509
    %v2511 = vsel %vm262, %v2328, -inf
    %v2512 = vrot.slane %v2511, 4
    %v2513 = vmax.f32 %v2511, %v2512
    %v2514 = vrot.slane %v2513, 2
    %v2515 = vmax.f32 %v2513, %v2514
    %v2516 = vrot.slane %v2515, 1
    %v2517 = vmax.f32 %v2515, %v2516
    %v2518 = vsel %vm262, %v2336, -inf
    %v2519 = vrot.slane %v2518, 4
    %v2520 = vmax.f32 %v2518, %v2519
    %v2521 = vrot.slane %v2520, 2
    %v2522 = vmax.f32 %v2520, %v2521
    %v2523 = vrot.slane %v2522, 1
    %v2524 = vmax.f32 %v2522, %v2523
    %v2525 = vsel %vm262, %v2335, -inf
    %v2526 = vrot.slane %v2525, 4
    %v2527 = vmax.f32 %v2525, %v2526
    %v2528 = vrot.slane %v2527, 2
    %v2529 = vmax.f32 %v2527, %v2528
    %v2530 = vrot.slane %v2529, 1
    %v2531 = vmax.f32 %v2529, %v2530
    %v2532 = vsel %vm262, %v2337, -inf
    %v2533 = vrot.slane %v2532, 4
    %v2534 = vmax.f32 %v2532, %v2533
    %v2535 = vrot.slane %v2534, 2
    %v2536 = vmax.f32 %v2534, %v2535
    %v2537 = vrot.slane %v2536, 1
    %v2538 = vmax.f32 %v2536, %v2537
    %v2539 = vsel %vm262, %v2345, -inf
    %v2540 = vrot.slane %v2539, 4
    %v2541 = vmax.f32 %v2539, %v2540
    %v2542 = vrot.slane %v2541, 2
    %v2543 = vmax.f32 %v2541, %v2542
    %v2544 = vrot.slane %v2543, 1
    %v2545 = vmax.f32 %v2543, %v2544
    %v2546 = vsel %vm262, %v2353, -inf
    %v2547 = vrot.slane %v2546, 4
    %v2548 = vmax.f32 %v2546, %v2547
    %v2549 = vrot.slane %v2548, 2
    %v2550 = vmax.f32 %v2548, %v2549
    %v2551 = vrot.slane %v2550, 1
    %v2552 = vmax.f32 %v2550, %v2551
    %v2553 = vsel %vm262, %v2352, -inf
    %v2554 = vrot.slane %v2553, 4
    %v2555 = vmax.f32 %v2553, %v2554
    %v2556 = vrot.slane %v2555, 2
    %v2557 = vmax.f32 %v2555, %v2556
    %v2558 = vrot.slane %v2557, 1
    %v2559 = vmax.f32 %v2557, %v2558
    %v2560 = vsel %vm262, %v2354, -inf
    %v2561 = vrot.slane %v2560, 4
    %v2562 = vmax.f32 %v2560, %v2561
    %v2563 = vrot.slane %v2562, 2
    %v2564 = vmax.f32 %v2562, %v2563
    %v2565 = vrot.slane %v2564, 1
    %v2566 = vmax.f32 %v2564, %v2565
    %v2567 = vsel %vm262, %v2362, -inf
    %v2568 = vrot.slane %v2567, 4
    %v2569 = vmax.f32 %v2567, %v2568
    %v2570 = vrot.slane %v2569, 2
    %v2571 = vmax.f32 %v2569, %v2570
    %v2572 = vrot.slane %v2571, 1
    %v2573 = vmax.f32 %v2571, %v2572
    %v2574 = vsel %vm262, %v2370, -inf
    %v2575 = vrot.slane %v2574, 4
    %v2576 = vmax.f32 %v2574, %v2575
    %v2577 = vrot.slane %v2576, 2
    %v2578 = vmax.f32 %v2576, %v2577
    %v2579 = vrot.slane %v2578, 1
    %v2580 = vmax.f32 %v2578, %v2579
    %v2581 = vsel %vm262, %v2369, -inf
    %v2582 = vrot.slane %v2581, 4
    %v2583 = vmax.f32 %v2581, %v2582
    %v2584 = vrot.slane %v2583, 2
    %v2585 = vmax.f32 %v2583, %v2584
    %v2586 = vrot.slane %v2585, 1
    %v2587 = vmax.f32 %v2585, %v2586
    %v2588 = vsel %vm262, %v2371, -inf
    %v2589 = vrot.slane %v2588, 4
    %v2590 = vmax.f32 %v2588, %v2589
    %v2591 = vrot.slane %v2590, 2
    %v2592 = vmax.f32 %v2590, %v2591
    %v2593 = vrot.slane %v2592, 1
    %v2594 = vmax.f32 %v2592, %v2593
    %v2595 = vsel %vm262, %v2379, -inf
    %v2596 = vrot.slane %v2595, 4
    %v2597 = vmax.f32 %v2595, %v2596
    %v2598 = vrot.slane %v2597, 2
    %v2599 = vmax.f32 %v2597, %v2598
    %v2600 = vrot.slane %v2599, 1
    %v2601 = vmax.f32 %v2599, %v2600
    %v2602 = vsel %vm262, %v2387, -inf
    %v2603 = vrot.slane %v2602, 4
    %v2604 = vmax.f32 %v2602, %v2603
    %v2605 = vrot.slane %v2604, 2
    %v2606 = vmax.f32 %v2604, %v2605
    %v2607 = vrot.slane %v2606, 1
    %v2608 = vmax.f32 %v2606, %v2607
    %v2609 = vsel %vm262, %v2386, -inf
    %v2610 = vrot.slane %v2609, 4
    %v2611 = vmax.f32 %v2609, %v2610
    %v2612 = vrot.slane %v2611, 2
    %v2613 = vmax.f32 %v2611, %v2612
    %v2614 = vrot.slane %v2613, 1
    %v2615 = vmax.f32 %v2613, %v2614
    %v2616 = vsel %vm262, %v2388, -inf
    %v2617 = vrot.slane %v2616, 4
    %v2618 = vmax.f32 %v2616, %v2617
    %v2619 = vrot.slane %v2618, 2
    %v2620 = vmax.f32 %v2618, %v2619
    %v2621 = vrot.slane %v2620, 1
    %v2622 = vmax.f32 %v2620, %v2621
    %v2623 = vsel %vm262, %v2396, -inf
    %v2624 = vrot.slane %v2623, 4
    %v2625 = vmax.f32 %v2623, %v2624
    %v2626 = vrot.slane %v2625, 2
    %v2627 = vmax.f32 %v2625, %v2626
    %v2628 = vrot.slane %v2627, 1
    %v2629 = vmax.f32 %v2627, %v2628
    %v2630 = vsel %vm262, %v2404, -inf
    %v2631 = vrot.slane %v2630, 4
    %v2632 = vmax.f32 %v2630, %v2631
    %v2633 = vrot.slane %v2632, 2
    %v2634 = vmax.f32 %v2632, %v2633
    %v2635 = vrot.slane %v2634, 1
    %v2636 = vmax.f32 %v2634, %v2635
    %v2637 = vsel %vm262, %v2403, -inf
    %v2638 = vrot.slane %v2637, 4
    %v2639 = vmax.f32 %v2637, %v2638
    %v2640 = vrot.slane %v2639, 2
    %v2641 = vmax.f32 %v2639, %v2640
    %v2642 = vrot.slane %v2641, 1
    %v2643 = vmax.f32 %v2641, %v2642
    %v2644 = vsel %vm262, %v2405, -inf
    %v2645 = vrot.slane %v2644, 4
    %v2646 = vmax.f32 %v2644, %v2645
    %v2647 = vrot.slane %v2646, 2
    %v2648 = vmax.f32 %v2646, %v2647
    %v2649 = vrot.slane %v2648, 1
    %v2650 = vmax.f32 %v2648, %v2649
    %v2651 = vsel %vm262, %v2413, -inf
    %v2652 = vrot.slane %v2651, 4
    %v2653 = vmax.f32 %v2651, %v2652
    %v2654 = vrot.slane %v2653, 2
    %v2655 = vmax.f32 %v2653, %v2654
    %v2656 = vrot.slane %v2655, 1
    %v2657 = vmax.f32 %v2655, %v2656
    %v2658 = vsel %vm262, %v2421, -inf
    %v2659 = vrot.slane %v2658, 4
    %v2660 = vmax.f32 %v2658, %v2659
    %v2661 = vrot.slane %v2660, 2
    %v2662 = vmax.f32 %v2660, %v2661
    %v2663 = vrot.slane %v2662, 1
    %v2664 = vmax.f32 %v2662, %v2663
    %v2665 = vsel %vm262, %v2420, -inf
    %v2666 = vrot.slane %v2665, 4
    %v2667 = vmax.f32 %v2665, %v2666
    %v2668 = vrot.slane %v2667, 2
    %v2669 = vmax.f32 %v2667, %v2668
    %v2670 = vrot.slane %v2669, 1
    %v2671 = vmax.f32 %v2669, %v2670
    %v2672 = vsel %vm262, %v2422, -inf
    %v2673 = vrot.slane %v2672, 4
    %v2674 = vmax.f32 %v2672, %v2673
    %v2675 = vrot.slane %v2674, 2
    %v2676 = vmax.f32 %v2674, %v2675
    %v2677 = vrot.slane %v2676, 1
    %v2678 = vmax.f32 %v2676, %v2677
    %v2711 = vsel %vm1742, %v2468, %v2461
    %v2712 = vsel %vm1645, %v2475, %v2711
    %v2713 = vsel %vm1647, %v2482, %v2712
    %v2714 = vsel %vm1649, %v2489, %v2713
    %v2715 = vsel %vm1651, %v2496, %v2714
    %v2716 = vsel %vm1653, %v2503, %v2715
    %v2717 = vsel %vm1655, %v2510, %v2716
    %v2718 = vsel %vm1742, %v2524, %v2517
    %v2719 = vsel %vm1645, %v2531, %v2718
    %v2720 = vsel %vm1647, %v2538, %v2719
    %v2721 = vsel %vm1649, %v2545, %v2720
    %v2722 = vsel %vm1651, %v2552, %v2721
    %v2723 = vsel %vm1653, %v2559, %v2722
    %v2724 = vsel %vm1655, %v2566, %v2723
    %v2725 = vsel %vm1742, %v2580, %v2573
    %v2726 = vsel %vm1645, %v2587, %v2725
    %v2727 = vsel %vm1647, %v2594, %v2726
    %v2728 = vsel %vm1649, %v2601, %v2727
    %v2729 = vsel %vm1651, %v2608, %v2728
    %v2730 = vsel %vm1653, %v2615, %v2729
    %v2731 = vsel %vm1655, %v2622, %v2730
    %v2732 = vsel %vm1742, %v2636, %v2629
    %v2733 = vsel %vm1645, %v2643, %v2732
    %v2734 = vsel %vm1647, %v2650, %v2733
    %v2735 = vsel %vm1649, %v2657, %v2734
    %v2736 = vsel %vm1651, %v2664, %v2735
    %v2737 = vsel %vm1653, %v2671, %v2736
    %v2738 = vsel %vm1655, %v2678, %v2737
    %v2744 = vunpack.c.l.s4 1935823168
    %v2745 = vunpack.c.0.s8 %v2744
    %v2746 = vlaneseq
    %v2747 = vshrl.u32 %v2746, 7
    %v2748 = vsub.s32 %v2745, %v2747
    %v2749 = vrot.slane %v2717, %v2748
    %v2751 = vunpack.c.l.s4 1935823168
    %v2752 = vunpack.c.0.s8 %v2751
    %v2753 = vlaneseq
    %v2754 = vshrl.u32 %v2753, 7
    %v2755 = vsub.s32 %v2752, %v2754
    %v2756 = vrot.slane %v2724, %v2755
    %v2758 = vunpack.c.l.s4 1935823168
    %v2759 = vunpack.c.0.s8 %v2758
    %v2760 = vlaneseq
    %v2761 = vshrl.u32 %v2760, 7
    %v2762 = vsub.s32 %v2759, %v2761
    %v2763 = vrot.slane %v2731, %v2762
    %v2765 = vunpack.c.l.s4 1935823168
    %v2766 = vunpack.c.0.s8 %v2765
    %v2767 = vlaneseq
    %v2768 = vshrl.u32 %v2767, 7
    %v2769 = vsub.s32 %v2766, %v2768
    %v2770 = vrot.slane %v2738, %v2769
    %v2775 = vcombine.low %v2749, %v2756
    %v2776 = vcombine.high %v2749, %v2756
    %v2777 = vcombine.low %v2763, %v2770
    %v2778 = vcombine.high %v2763, %v2770
    %v2780 = vunpack.c.l.s4 1983009808
    %v2781 = vunpack.c.0.s8 %v2780
    %v2782 = vlaneseq
    %v2783 = vshrl.u32 %v2782, 7
    %v2784 = vsub.s32 %v2781, %v2783
    %v2785 = vrot.slane %v2775, %v2784
    %v2787 = vunpack.c.l.s4 1983009808
    %v2788 = vunpack.c.0.s8 %v2787
    %v2789 = vlaneseq
    %v2790 = vshrl.u32 %v2789, 7
    %v2791 = vsub.s32 %v2788, %v2790
    %v2792 = vrot.slane %v2776, %v2791
    %v2794 = vunpack.c.l.s4 1983009808
    %v2795 = vunpack.c.0.s8 %v2794
    %v2796 = vlaneseq
    %v2797 = vshrl.u32 %v2796, 7
    %v2798 = vsub.s32 %v2795, %v2797
    %v2799 = vrot.slane %v2777, %v2798
    %v2801 = vunpack.c.l.s4 1983009808
    %v2802 = vunpack.c.0.s8 %v2801
    %v2803 = vlaneseq
    %v2804 = vshrl.u32 %v2803, 7
    %v2805 = vsub.s32 %v2802, %v2804
    %v2806 = vrot.slane %v2778, %v2805
    %v2807 = vcombine.low %v2785, %v2799
    %v2808 = vcombine.high %v2785, %v2799
    %v2809 = vcombine.low %v2792, %v2806
    %v2810 = vcombine.high %v2792, %v2806
    %v2815 = vpack.c.bf16 %v2807, %v2807
    %v2816 = vpack.c.bf16 %v2808, %v2808
    %v2817 = vpack.c.bf16 %v2809, %v2809
    %v2818 = vpack.c.bf16 %v2810, %v2810
    %v2819 = vld [vmem:[#allocation2] sm:$0xff]
    %v2820 = vld [vmem:[#allocation2 + $0x8] sm:$0xff]
    %v2821 = vld [vmem:[#allocation2 + $0x10] sm:$0xff]
    %v2822 = vld [vmem:[#allocation2 + $0x18] sm:$0xff]
    %v2823 = vld [vmem:[#allocation2 + $0x20] sm:$0xff]
    %v2824 = vld [vmem:[#allocation2 + $0x28] sm:$0xff]
    %v2825 = vld [vmem:[#allocation2 + $0x30] sm:$0xff]
    %v2826 = vld [vmem:[#allocation2 + $0x38] sm:$0xff]
    %v2827 = vld [vmem:[#allocation2 + $0x40] sm:$0xff]
    %v2828 = vld [vmem:[#allocation2 + $0x48] sm:$0xff]
    %v2829 = vld [vmem:[#allocation2 + $0x50] sm:$0xff]
    %v2830 = vld [vmem:[#allocation2 + $0x58] sm:$0xff]
    %v2831 = vld [vmem:[#allocation2 + $0x60] sm:$0xff]
    %v2832 = vld [vmem:[#allocation2 + $0x68] sm:$0xff]
    %v2833 = vld [vmem:[#allocation2 + $0x70] sm:$0xff]
    %v2834 = vld [vmem:[#allocation2 + $0x78] sm:$0xff]
    %v2835 = vld [vmem:[#allocation2 + $0x80] sm:$0xff]
    %v2836 = vld [vmem:[#allocation2 + $0x88] sm:$0xff]
    %v2837 = vld [vmem:[#allocation2 + $0x90] sm:$0xff]
    %v2838 = vld [vmem:[#allocation2 + $0x98] sm:$0xff]
    %v2839 = vld [vmem:[#allocation2 + $0xa0] sm:$0xff]
    %v2840 = vld [vmem:[#allocation2 + $0xa8] sm:$0xff]
    %v2841 = vld [vmem:[#allocation2 + $0xb0] sm:$0xff]
    %v2842 = vld [vmem:[#allocation2 + $0xb8] sm:$0xff]
    %v2843 = vld [vmem:[#allocation2 + $0xc0] sm:$0xff]
    %v2844 = vld [vmem:[#allocation2 + $0xc8] sm:$0xff]
    %v2845 = vld [vmem:[#allocation2 + $0xd0] sm:$0xff]
    %v2846 = vld [vmem:[#allocation2 + $0xd8] sm:$0xff]
    %v2847 = vld [vmem:[#allocation2 + $0xe0] sm:$0xff]
    %v2848 = vld [vmem:[#allocation2 + $0xe8] sm:$0xff]
    %v2849 = vld [vmem:[#allocation2 + $0xf0] sm:$0xff]
    %v2850 = vld [vmem:[#allocation2 + $0xf8] sm:$0xff]
    %v2851 = vld [vmem:[#allocation2 + $0x100] sm:$0xff]
    %v2852 = vld [vmem:[#allocation2 + $0x108] sm:$0xff]
    %v2853 = vld [vmem:[#allocation2 + $0x110] sm:$0xff]
    %v2854 = vld [vmem:[#allocation2 + $0x118] sm:$0xff]
    %v2855 = vld [vmem:[#allocation2 + $0x120] sm:$0xff]
    %v2856 = vld [vmem:[#allocation2 + $0x128] sm:$0xff]
    %v2857 = vld [vmem:[#allocation2 + $0x130] sm:$0xff]
    %v2858 = vld [vmem:[#allocation2 + $0x138] sm:$0xff]
    %v2859 = vld [vmem:[#allocation2 + $0x140] sm:$0xff]
    %v2860 = vld [vmem:[#allocation2 + $0x148] sm:$0xff]
    %v2861 = vld [vmem:[#allocation2 + $0x150] sm:$0xff]
    %v2862 = vld [vmem:[#allocation2 + $0x158] sm:$0xff]
    %v2863 = vld [vmem:[#allocation2 + $0x160] sm:$0xff]
    %v2864 = vld [vmem:[#allocation2 + $0x168] sm:$0xff]
    %v2865 = vld [vmem:[#allocation2 + $0x170] sm:$0xff]
    %v2866 = vld [vmem:[#allocation2 + $0x178] sm:$0xff]
    %v2867 = vld [vmem:[#allocation2 + $0x180] sm:$0xff]
    %v2868 = vld [vmem:[#allocation2 + $0x188] sm:$0xff]
    %v2869 = vld [vmem:[#allocation2 + $0x190] sm:$0xff]
    %v2870 = vld [vmem:[#allocation2 + $0x198] sm:$0xff]
    %v2871 = vld [vmem:[#allocation2 + $0x1a0] sm:$0xff]
    %v2872 = vld [vmem:[#allocation2 + $0x1a8] sm:$0xff]
    %v2873 = vld [vmem:[#allocation2 + $0x1b0] sm:$0xff]
    %v2874 = vld [vmem:[#allocation2 + $0x1b8] sm:$0xff]
    %v2875 = vld [vmem:[#allocation2 + $0x1c0] sm:$0xff]
    %v2876 = vld [vmem:[#allocation2 + $0x1c8] sm:$0xff]
    %v2877 = vld [vmem:[#allocation2 + $0x1d0] sm:$0xff]
    %v2878 = vld [vmem:[#allocation2 + $0x1d8] sm:$0xff]
    %v2879 = vld [vmem:[#allocation2 + $0x1e0] sm:$0xff]
    %v2880 = vld [vmem:[#allocation2 + $0x1e8] sm:$0xff]
    %v2881 = vld [vmem:[#allocation2 + $0x1f0] sm:$0xff]
    %v2882 = vld [vmem:[#allocation2 + $0x1f8] sm:$0xff]
    %v2883 = vld [vmem:[%s6] sm:$0x3]
    %v2885 = vlaneseq
    %v2886 = vshrl.u32 %v2885, 7
    %v2887 = vsub.s32 0, %v2886
    %v2888 = vrot.slane %v2883, %v2887
    %v2889 = vlaneseq
    %v2890 = vshrl.u32 %v2889, 7
    %v2891 = vsub.s32 1, %v2890
    %v2892 = vrot.slane %v2883, %v2891
    %v2959 = vunpack.c.l.b16 %v2819
    %v2960 = vunpack.c.h.b16 %v2819
    %v2961 = vunpack.c.l.b16 %v2820
    %v2962 = vunpack.c.h.b16 %v2820
    %v2963 = vunpack.c.l.b16 %v2821
    %v2964 = vunpack.c.h.b16 %v2821
    %v2965 = vunpack.c.l.b16 %v2822
    %v2966 = vunpack.c.h.b16 %v2822
    %v2967 = vunpack.c.l.b16 %v2823
    %v2968 = vunpack.c.h.b16 %v2823
    %v2969 = vunpack.c.l.b16 %v2824
    %v2970 = vunpack.c.h.b16 %v2824
    %v2971 = vunpack.c.l.b16 %v2825
    %v2972 = vunpack.c.h.b16 %v2825
    %v2973 = vunpack.c.l.b16 %v2826
    %v2974 = vunpack.c.h.b16 %v2826
    %v2975 = vunpack.c.l.b16 %v2827
    %v2976 = vunpack.c.h.b16 %v2827
    %v2977 = vunpack.c.l.b16 %v2828
    %v2978 = vunpack.c.h.b16 %v2828
    %v2979 = vunpack.c.l.b16 %v2829
    %v2980 = vunpack.c.h.b16 %v2829
    %v2981 = vunpack.c.l.b16 %v2830
    %v2982 = vunpack.c.h.b16 %v2830
    %v2983 = vunpack.c.l.b16 %v2831
    %v2984 = vunpack.c.h.b16 %v2831
    %v2985 = vunpack.c.l.b16 %v2832
    %v2986 = vunpack.c.h.b16 %v2832
    %v2987 = vunpack.c.l.b16 %v2833
    %v2988 = vunpack.c.h.b16 %v2833
    %v2989 = vunpack.c.l.b16 %v2834
    %v2990 = vunpack.c.h.b16 %v2834
    %v2991 = vunpack.c.l.b16 %v2835
    %v2992 = vunpack.c.h.b16 %v2835
    %v2993 = vunpack.c.l.b16 %v2836
    %v2994 = vunpack.c.h.b16 %v2836
    %v2995 = vunpack.c.l.b16 %v2837
    %v2996 = vunpack.c.h.b16 %v2837
    %v2997 = vunpack.c.l.b16 %v2838
    %v2998 = vunpack.c.h.b16 %v2838
    %v2999 = vunpack.c.l.b16 %v2839
    %v3000 = vunpack.c.h.b16 %v2839
    %v3001 = vunpack.c.l.b16 %v2840
    %v3002 = vunpack.c.h.b16 %v2840
    %v3003 = vunpack.c.l.b16 %v2841
    %v3004 = vunpack.c.h.b16 %v2841
    %v3005 = vunpack.c.l.b16 %v2842
    %v3006 = vunpack.c.h.b16 %v2842
    %v3007 = vunpack.c.l.b16 %v2843
    %v3008 = vunpack.c.h.b16 %v2843
    %v3009 = vunpack.c.l.b16 %v2844
    %v3010 = vunpack.c.h.b16 %v2844
    %v3011 = vunpack.c.l.b16 %v2845
    %v3012 = vunpack.c.h.b16 %v2845
    %v3013 = vunpack.c.l.b16 %v2846
    %v3014 = vunpack.c.h.b16 %v2846
    %v3015 = vunpack.c.l.b16 %v2847
    %v3016 = vunpack.c.h.b16 %v2847
    %v3017 = vunpack.c.l.b16 %v2848
    %v3018 = vunpack.c.h.b16 %v2848
    %v3019 = vunpack.c.l.b16 %v2849
    %v3020 = vunpack.c.h.b16 %v2849
    %v3021 = vunpack.c.l.b16 %v2850
    %v3022 = vunpack.c.h.b16 %v2850
    %v3023 = vunpack.c.l.b16 %v2851
    %v3024 = vunpack.c.h.b16 %v2851
    %v3025 = vunpack.c.l.b16 %v2852
    %v3026 = vunpack.c.h.b16 %v2852
    %v3027 = vunpack.c.l.b16 %v2853
    %v3028 = vunpack.c.h.b16 %v2853
    %v3029 = vunpack.c.l.b16 %v2854
    %v3030 = vunpack.c.h.b16 %v2854
    %v3031 = vunpack.c.l.b16 %v2855
    %v3032 = vunpack.c.h.b16 %v2855
    %v3033 = vunpack.c.l.b16 %v2856
    %v3034 = vunpack.c.h.b16 %v2856
    %v3035 = vunpack.c.l.b16 %v2857
    %v3036 = vunpack.c.h.b16 %v2857
    %v3037 = vunpack.c.l.b16 %v2858
    %v3038 = vunpack.c.h.b16 %v2858
    %v3039 = vunpack.c.l.b16 %v2859
    %v3040 = vunpack.c.h.b16 %v2859
    %v3041 = vunpack.c.l.b16 %v2860
    %v3042 = vunpack.c.h.b16 %v2860
    %v3043 = vunpack.c.l.b16 %v2861
    %v3044 = vunpack.c.h.b16 %v2861
    %v3045 = vunpack.c.l.b16 %v2862
    %v3046 = vunpack.c.h.b16 %v2862
    %v3047 = vunpack.c.l.b16 %v2863
    %v3048 = vunpack.c.h.b16 %v2863
    %v3049 = vunpack.c.l.b16 %v2864
    %v3050 = vunpack.c.h.b16 %v2864
    %v3051 = vunpack.c.l.b16 %v2865
    %v3052 = vunpack.c.h.b16 %v2865
    %v3053 = vunpack.c.l.b16 %v2866
    %v3054 = vunpack.c.h.b16 %v2866
    %v3055 = vunpack.c.l.b16 %v2867
    %v3056 = vunpack.c.h.b16 %v2867
    %v3057 = vunpack.c.l.b16 %v2868
    %v3058 = vunpack.c.h.b16 %v2868
    %v3059 = vunpack.c.l.b16 %v2869
    %v3060 = vunpack.c.h.b16 %v2869
    %v3061 = vunpack.c.l.b16 %v2870
    %v3062 = vunpack.c.h.b16 %v2870
    %v3063 = vunpack.c.l.b16 %v2871
    %v3064 = vunpack.c.h.b16 %v2871
    %v3065 = vunpack.c.l.b16 %v2872
    %v3066 = vunpack.c.h.b16 %v2872
    %v3067 = vunpack.c.l.b16 %v2873
    %v3068 = vunpack.c.h.b16 %v2873
    %v3069 = vunpack.c.l.b16 %v2874
    %v3070 = vunpack.c.h.b16 %v2874
    %v3071 = vunpack.c.l.b16 %v2875
    %v3072 = vunpack.c.h.b16 %v2875
    %v3073 = vunpack.c.l.b16 %v2876
    %v3074 = vunpack.c.h.b16 %v2876
    %v3075 = vunpack.c.l.b16 %v2877
    %v3076 = vunpack.c.h.b16 %v2877
    %v3077 = vunpack.c.l.b16 %v2878
    %v3078 = vunpack.c.h.b16 %v2878
    %v3079 = vunpack.c.l.b16 %v2879
    %v3080 = vunpack.c.h.b16 %v2879
    %v3081 = vunpack.c.l.b16 %v2880
    %v3082 = vunpack.c.h.b16 %v2880
    %v3083 = vunpack.c.l.b16 %v2881
    %v3084 = vunpack.c.h.b16 %v2881
    %v3085 = vunpack.c.l.b16 %v2882
    %v3086 = vunpack.c.h.b16 %v2882
    %v3087 = vpack.c.b16 %v2961, %v2959
    %v3088 = vpack.c.b16 %v2962, %v2960
    %v3089 = vpack.c.b16 %v2965, %v2963
    %v3090 = vpack.c.b16 %v2966, %v2964
    %v3091 = vpack.c.b16 %v2969, %v2967
    %v3092 = vpack.c.b16 %v2970, %v2968
    %v3093 = vpack.c.b16 %v2973, %v2971
    %v3094 = vpack.c.b16 %v2974, %v2972
    %v3095 = vpack.c.b16 %v2977, %v2975
    %v3096 = vpack.c.b16 %v2978, %v2976
    %v3097 = vpack.c.b16 %v2981, %v2979
    %v3098 = vpack.c.b16 %v2982, %v2980
    %v3099 = vpack.c.b16 %v2985, %v2983
    %v3100 = vpack.c.b16 %v2986, %v2984
    %v3101 = vpack.c.b16 %v2989, %v2987
    %v3102 = vpack.c.b16 %v2990, %v2988
    %v3103 = vpack.c.b16 %v2993, %v2991
    %v3104 = vpack.c.b16 %v2994, %v2992
    %v3105 = vpack.c.b16 %v2997, %v2995
    %v3106 = vpack.c.b16 %v2998, %v2996
    %v3107 = vpack.c.b16 %v3001, %v2999
    %v3108 = vpack.c.b16 %v3002, %v3000
    %v3109 = vpack.c.b16 %v3005, %v3003
    %v3110 = vpack.c.b16 %v3006, %v3004
    %v3111 = vpack.c.b16 %v3009, %v3007
    %v3112 = vpack.c.b16 %v3010, %v3008
    %v3113 = vpack.c.b16 %v3013, %v3011
    %v3114 = vpack.c.b16 %v3014, %v3012
    %v3115 = vpack.c.b16 %v3017, %v3015
    %v3116 = vpack.c.b16 %v3018, %v3016
    %v3117 = vpack.c.b16 %v3021, %v3019
    %v3118 = vpack.c.b16 %v3022, %v3020
    %v3119 = vpack.c.b16 %v3025, %v3023
    %v3120 = vpack.c.b16 %v3026, %v3024
    %v3121 = vpack.c.b16 %v3029, %v3027
    %v3122 = vpack.c.b16 %v3030, %v3028
    %v3123 = vpack.c.b16 %v3033, %v3031
    %v3124 = vpack.c.b16 %v3034, %v3032
    %v3125 = vpack.c.b16 %v3037, %v3035
    %v3126 = vpack.c.b16 %v3038, %v3036
    %v3127 = vpack.c.b16 %v3041, %v3039
    %v3128 = vpack.c.b16 %v3042, %v3040
    %v3129 = vpack.c.b16 %v3045, %v3043
    %v3130 = vpack.c.b16 %v3046, %v3044
    %v3131 = vpack.c.b16 %v3049, %v3047
    %v3132 = vpack.c.b16 %v3050, %v3048
    %v3133 = vpack.c.b16 %v3053, %v3051
    %v3134 = vpack.c.b16 %v3054, %v3052
    %v3135 = vpack.c.b16 %v3057, %v3055
    %v3136 = vpack.c.b16 %v3058, %v3056
    %v3137 = vpack.c.b16 %v3061, %v3059
    %v3138 = vpack.c.b16 %v3062, %v3060
    %v3139 = vpack.c.b16 %v3065, %v3063
    %v3140 = vpack.c.b16 %v3066, %v3064
    %v3141 = vpack.c.b16 %v3069, %v3067
    %v3142 = vpack.c.b16 %v3070, %v3068
    %v3143 = vpack.c.b16 %v3073, %v3071
    %v3144 = vpack.c.b16 %v3074, %v3072
    %v3145 = vpack.c.b16 %v3077, %v3075
    %v3146 = vpack.c.b16 %v3078, %v3076
    %v3147 = vpack.c.b16 %v3081, %v3079
    %v3148 = vpack.c.b16 %v3082, %v3080
    %v3149 = vpack.c.b16 %v3085, %v3083
    %v3150 = vpack.c.b16 %v3086, %v3084
    %3215 = vmatprep.subr.bf16.mxu0 %v3102
    %3216 = vmatpush1.bf16.msra.mxu0 %v3101
    %3217 = vmatprep.subr.bf16.mxu0 %v3100
    %3218 = vmatpush1.bf16.msra.mxu0 %v3099
    %3219 = vmatprep.subr.bf16.mxu0 %v3098
    %3220 = vmatpush1.bf16.msra.mxu0 %v3097
    %3221 = vmatprep.subr.bf16.mxu0 %v3096
    %3222 = vmatpush1.bf16.msra.mxu0 %v3095
    %3223 = vmatprep.subr.bf16.mxu0 %v3094
    %3224 = vmatpush1.bf16.msra.mxu0 %v3093
    %3225 = vmatprep.subr.bf16.mxu0 %v3092
    %3226 = vmatpush1.bf16.msra.mxu0 %v3091
    %3227 = vmatprep.subr.bf16.mxu0 %v3090
    %3228 = vmatpush1.bf16.msra.mxu0 %v3089
    %3229 = vmatprep.subr.bf16.mxu0 %v3088
    %3230 = vmatpush1.bf16.msra.mxu0 %v3087
    %3231 = vmatprep.subr.bf16.mxu0 %v3118
    %3232 = vmatpush2.bf16.msra.mxu0 %v3117
    %3233 = vmatprep.subr.bf16.mxu0 %v3116
    %3234 = vmatpush2.bf16.msra.mxu0 %v3115
    %3235 = vmatprep.subr.bf16.mxu0 %v3114
    %3236 = vmatpush2.bf16.msra.mxu0 %v3113
    %3237 = vmatprep.subr.bf16.mxu0 %v3112
    %3238 = vmatpush2.bf16.msra.mxu0 %v3111
    %3239 = vmatprep.subr.bf16.mxu0 %v3110
    %3240 = vmatpush2.bf16.msra.mxu0 %v3109
    %3241 = vmatprep.subr.bf16.mxu0 %v3108
    %3242 = vmatpush2.bf16.msra.mxu0 %v3107
    %3243 = vmatprep.subr.bf16.mxu0 %v3106
    %3244 = vmatpush2.bf16.msra.mxu0 %v3105
    %3245 = vmatprep.subr.bf16.mxu0 %v3104
    %3246 = vmatpush2.bf16.msra.mxu0 %v3103
    %3247 = vmatprep.mubr.bf16.mxu0 %v2816
    %3248 = vmatmul.mubr.bf16.gmra.mxu0 %v2815
    %v3249 = vpop.f32.mrf.mxu0
    %v3250 = vadd.f32 %v2888, %v3249
    %v3251 = vpop.f32.mrf.mxu0
    %v3252 = vadd.f32 %v2892, %v3251
    %v3253 = vpop.f32.mrf.mxu0
    %v3254 = vpop.f32.mrf.mxu0
    %3255 = vdwg.mxu0
    %3256 = vmatprep.subr.bf16.mxu0 %v3134
    %3257 = vmatpush1.bf16.msra.mxu0 %v3133
    %3258 = vmatprep.subr.bf16.mxu0 %v3132
    %3259 = vmatpush1.bf16.msra.mxu0 %v3131
    %3260 = vmatprep.subr.bf16.mxu0 %v3130
    %3261 = vmatpush1.bf16.msra.mxu0 %v3129
    %3262 = vmatprep.subr.bf16.mxu0 %v3128
    %3263 = vmatpush1.bf16.msra.mxu0 %v3127
    %3264 = vmatprep.subr.bf16.mxu0 %v3126
    %3265 = vmatpush1.bf16.msra.mxu0 %v3125
    %3266 = vmatprep.subr.bf16.mxu0 %v3124
    %3267 = vmatpush1.bf16.msra.mxu0 %v3123
    %3268 = vmatprep.subr.bf16.mxu0 %v3122
    %3269 = vmatpush1.bf16.msra.mxu0 %v3121
    %3270 = vmatprep.subr.bf16.mxu0 %v3120
    %3271 = vmatpush1.bf16.msra.mxu0 %v3119
    %3272 = vmatprep.subr.bf16.mxu0 %v3150
    %3273 = vmatpush2.bf16.msra.mxu0 %v3149
    %3274 = vmatprep.subr.bf16.mxu0 %v3148
    %3275 = vmatpush2.bf16.msra.mxu0 %v3147
    %3276 = vmatprep.subr.bf16.mxu0 %v3146
    %3277 = vmatpush2.bf16.msra.mxu0 %v3145
    %3278 = vmatprep.subr.bf16.mxu0 %v3144
    %3279 = vmatpush2.bf16.msra.mxu0 %v3143
    %3280 = vmatprep.subr.bf16.mxu0 %v3142
    %3281 = vmatpush2.bf16.msra.mxu0 %v3141
    %3282 = vmatprep.subr.bf16.mxu0 %v3140
    %3283 = vmatpush2.bf16.msra.mxu0 %v3139
    %3284 = vmatprep.subr.bf16.mxu0 %v3138
    %3285 = vmatpush2.bf16.msra.mxu0 %v3137
    %3286 = vmatprep.subr.bf16.mxu0 %v3136
    %3287 = vmatpush2.bf16.msra.mxu0 %v3135
    %3288 = vmatprep.mubr.bf16.mxu0 %v2818
    %3289 = vmatmul.mubr.bf16.gmra.mxu0 %v2817
    %v3290 = vpop.f32.mrf.mxu0
    %v3291 = vadd.f32 %v3250, %v3290
    %v3292 = vpop.f32.mrf.mxu0
    %v3293 = vadd.f32 %v3252, %v3292
    %v3294 = vpop.f32.mrf.mxu0
    %v3295 = vpop.f32.mrf.mxu0
    %3296 = vdwg.mxu0
    %v3297 = vmax.f32 %v3291, 0.0
    %v3298 = vmax.f32 %v3293, 0.0
    %v3299 = vpack.c.bf16 %v3297, %v3297
    %v3300 = vpack.c.bf16 %v3298, %v3298
    %v3301 = vld [vmem:[%s7] sm:$0xf]
    %v3302 = vld [vmem:[%s7 + $0x4] sm:$0xf]
    %v3303 = vld [vmem:[%s7 + $0x8] sm:$0xf]
    %v3304 = vld [vmem:[%s7 + $0xc] sm:$0xf]
    %v3305 = vld [vmem:[%s7 + $0x10] sm:$0xf]
    %v3306 = vld [vmem:[%s7 + $0x14] sm:$0xf]
    %v3307 = vld [vmem:[%s7 + $0x18] sm:$0xf]
    %v3308 = vld [vmem:[%s7 + $0x1c] sm:$0xf]
    %v3309 = vld [vmem:[%s7 + $0x20] sm:$0xf]
    %v3310 = vld [vmem:[%s7 + $0x24] sm:$0xf]
    %v3311 = vld [vmem:[%s7 + $0x28] sm:$0xf]
    %v3312 = vld [vmem:[%s7 + $0x2c] sm:$0xf]
    %v3313 = vld [vmem:[%s7 + $0x30] sm:$0xf]
    %v3314 = vld [vmem:[%s7 + $0x34] sm:$0xf]
    %v3315 = vld [vmem:[%s7 + $0x38] sm:$0xf]
    %v3316 = vld [vmem:[%s7 + $0x3c] sm:$0xf]
    %v3317 = vld [vmem:[%s7 + $0x40] sm:$0xf]
    %v3318 = vld [vmem:[%s7 + $0x44] sm:$0xf]
    %v3319 = vld [vmem:[%s7 + $0x48] sm:$0xf]
    %v3320 = vld [vmem:[%s7 + $0x4c] sm:$0xf]
    %v3321 = vld [vmem:[%s7 + $0x50] sm:$0xf]
    %v3322 = vld [vmem:[%s7 + $0x54] sm:$0xf]
    %v3323 = vld [vmem:[%s7 + $0x58] sm:$0xf]
    %v3324 = vld [vmem:[%s7 + $0x5c] sm:$0xf]
    %v3325 = vld [vmem:[%s7 + $0x60] sm:$0xf]
    %v3326 = vld [vmem:[%s7 + $0x64] sm:$0xf]
    %v3327 = vld [vmem:[%s7 + $0x68] sm:$0xf]
    %v3328 = vld [vmem:[%s7 + $0x6c] sm:$0xf]
    %v3329 = vld [vmem:[%s7 + $0x70] sm:$0xf]
    %v3330 = vld [vmem:[%s7 + $0x74] sm:$0xf]
    %v3331 = vld [vmem:[%s7 + $0x78] sm:$0xf]
    %v3332 = vld [vmem:[%s7 + $0x7c] sm:$0xf]
    %v3333 = vld [vmem:[%s8] sm:$0x1]
    %v3335 = vlaneseq
    %v3336 = vshrl.u32 %v3335, 7
    %v3337 = vsub.s32 0, %v3336
    %v3338 = vrot.slane %v3333, %v3337
    %v3372 = vunpack.c.l.b16 %v3301
    %v3373 = vunpack.c.l.b16 %v3302
    %v3374 = vunpack.c.l.b16 %v3303
    %v3375 = vunpack.c.l.b16 %v3304
    %v3376 = vunpack.c.l.b16 %v3305
    %v3377 = vunpack.c.l.b16 %v3306
    %v3378 = vunpack.c.l.b16 %v3307
    %v3379 = vunpack.c.l.b16 %v3308
    %v3380 = vunpack.c.l.b16 %v3309
    %v3381 = vunpack.c.l.b16 %v3310
    %v3382 = vunpack.c.l.b16 %v3311
    %v3383 = vunpack.c.l.b16 %v3312
    %v3384 = vunpack.c.l.b16 %v3313
    %v3385 = vunpack.c.l.b16 %v3314
    %v3386 = vunpack.c.l.b16 %v3315
    %v3387 = vunpack.c.l.b16 %v3316
    %v3388 = vunpack.c.l.b16 %v3317
    %v3389 = vunpack.c.l.b16 %v3318
    %v3390 = vunpack.c.l.b16 %v3319
    %v3391 = vunpack.c.l.b16 %v3320
    %v3392 = vunpack.c.l.b16 %v3321
    %v3393 = vunpack.c.l.b16 %v3322
    %v3394 = vunpack.c.l.b16 %v3323
    %v3395 = vunpack.c.l.b16 %v3324
    %v3396 = vunpack.c.l.b16 %v3325
    %v3397 = vunpack.c.l.b16 %v3326
    %v3398 = vunpack.c.l.b16 %v3327
    %v3399 = vunpack.c.l.b16 %v3328
    %v3400 = vunpack.c.l.b16 %v3329
    %v3401 = vunpack.c.l.b16 %v3330
    %v3402 = vunpack.c.l.b16 %v3331
    %v3403 = vunpack.c.l.b16 %v3332
    %v3404 = vpack.c.b16 %v3373, %v3372
    %v3405 = vpack.c.b16 %v3375, %v3374
    %v3406 = vpack.c.b16 %v3377, %v3376
    %v3407 = vpack.c.b16 %v3379, %v3378
    %v3408 = vpack.c.b16 %v3381, %v3380
    %v3409 = vpack.c.b16 %v3383, %v3382
    %v3410 = vpack.c.b16 %v3385, %v3384
    %v3411 = vpack.c.b16 %v3387, %v3386
    %v3412 = vpack.c.b16 %v3389, %v3388
    %v3413 = vpack.c.b16 %v3391, %v3390
    %v3414 = vpack.c.b16 %v3393, %v3392
    %v3415 = vpack.c.b16 %v3395, %v3394
    %v3416 = vpack.c.b16 %v3397, %v3396
    %v3417 = vpack.c.b16 %v3399, %v3398
    %v3418 = vpack.c.b16 %v3401, %v3400
    %v3419 = vpack.c.b16 %v3403, %v3402
    %3436 = vmatprep.subr.bf16.mxu0 0
    %3437 = vmatpush1.bf16.msra.mxu0 %v3411
    %3438 = vmatprep.subr.bf16.mxu0 0
    %3439 = vmatpush1.bf16.msra.mxu0 %v3410
    %3440 = vmatprep.subr.bf16.mxu0 0
    %3441 = vmatpush1.bf16.msra.mxu0 %v3409
    %3442 = vmatprep.subr.bf16.mxu0 0
    %3443 = vmatpush1.bf16.msra.mxu0 %v3408
    %3444 = vmatprep.subr.bf16.mxu0 0
    %3445 = vmatpush1.bf16.msra.mxu0 %v3407
    %3446 = vmatprep.subr.bf16.mxu0 0
    %3447 = vmatpush1.bf16.msra.mxu0 %v3406
    %3448 = vmatprep.subr.bf16.mxu0 0
    %3449 = vmatpush1.bf16.msra.mxu0 %v3405
    %3450 = vmatprep.subr.bf16.mxu0 0
    %3451 = vmatpush1.bf16.msra.mxu0 %v3404
    %3452 = vmatprep.subr.bf16.mxu0 0
    %3453 = vmatpush2.bf16.msra.mxu0 %v3419
    %3454 = vmatprep.subr.bf16.mxu0 0
    %3455 = vmatpush2.bf16.msra.mxu0 %v3418
    %3456 = vmatprep.subr.bf16.mxu0 0
    %3457 = vmatpush2.bf16.msra.mxu0 %v3417
    %3458 = vmatprep.subr.bf16.mxu0 0
    %3459 = vmatpush2.bf16.msra.mxu0 %v3416
    %3460 = vmatprep.subr.bf16.mxu0 0
    %3461 = vmatpush2.bf16.msra.mxu0 %v3415
    %3462 = vmatprep.subr.bf16.mxu0 0
    %3463 = vmatpush2.bf16.msra.mxu0 %v3414
    %3464 = vmatprep.subr.bf16.mxu0 0
    %3465 = vmatpush2.bf16.msra.mxu0 %v3413
    %3466 = vmatprep.subr.bf16.mxu0 0
    %3467 = vmatpush2.bf16.msra.mxu0 %v3412
    %3468 = vmatprep.mubr.bf16.mxu0 %v3300
    %3469 = vmatmul.mubr.bf16.gmra.mxu0 %v3299
    %v3470 = vpop.f32.mrf.mxu0
    %v3471 = vadd.f32 %v3338, %v3470
    %v3472 = vpop.f32.mrf.mxu0
    %v3473 = vpop.f32.mrf.mxu0
    %v3474 = vpop.f32.mrf.mxu0
    %3475 = vdwg.mxu0
    %3476 = vst [vmem:[#allocation5] sm:$0xff] %v3471
    // Predicated region
    $region42: #{tpu_custom_call.1} parent=1 // pred_check
      _
    $region43: #{tpu_custom_call.1} parent=1 // pred_check_branch
      %3478 = sbr.rel (0) target = $region45
    $region44: #{tpu_custom_call.1} parent=1 // pred_region
      %s3480 = ssub.s32 128, 128
      %3481 = vsyncadd [#allocation4], %s3480
      %s3483 = sshll.u32 [#allocation5], 4
      %s3484 = int_to_ptr.vmem [resolvable:$true] %s3483
      %3486 = dma.vmem_to_hbm [thread:$0]  %s3484, 128, %s9, [#allocation4]
    $region45: #{tpu_custom_call.1} parent=1 // pred_fallthru
      _
    // Predicated region
    $region46: #{tpu_custom_call.1} parent=1 // pred_check
      _
    $region47: #{tpu_custom_call.1} parent=1 // pred_check_branch
      %3488 = sbr.rel (0) target = $region49
    $region48: #{tpu_custom_call.1} parent=1 // pred_region
      %3489 = dma.done [#allocation4], 128
    $region49: #{tpu_custom_call.1} parent=1 // pred_fallthru
      _
    %3490 = vsyncpa [#allocation3], 1
    %3491 = vsyncpa [#allocation4], 1

</llo_original>
